<compile_context>
chip_gen: v7x
topology: tpu7x:2x2x1
jax: 0.10.0
libtpu: 0.0.40
codegen_flags: <defaults>
</compile_context>

<pallas_src>
import jax
import jax.numpy as jnp
from jax.experimental import pallas as pl
from jax.experimental.pallas import tpu as pltpu


def _upsample_band_kernel(x_ref, p_ref, s_ref, o_ref):
    """One grid step = one image n and one band of R super-rows.

    x_ref: (1, C, R, GW)            input band (compute dtype), GW = G*W
    p_ref: (4*C_out*C + C_out,)     SMEM f32 scalars: weights (ki,kj,co major, c minor)
                                    followed by the bias.
    s_ref: (2, GW, 2*GW)            halved interleave matrices  P[kj][j, 2j+kj] = 1   (G == 1)
           (4, GW, 4*GW)            grouped scatter matrices
                                    E[2ki+kj][g*W+j, g*4W + ki*2W + 2j + kj] = 1       (G > 1)
    o_ref: (1, C_out, R, 4*GW)      output band; lane order (g, ki, j, kj) is already
                                    NCHW row-major, so the final reshape is free.
    """
    _, C, R, GW = x_ref.shape
    C_out = o_ref.shape[1]
    halved = s_ref.shape[0] == 2
    s_dtype = s_ref.dtype
    n_w = 4 * C_out * C

    # Hoisted: per-channel input slices cast to f32 once, reused by all four taps.
    xs = [x_ref[0, c].astype(jnp.float32) for c in range(C)]          # C x (R, GW)

    def mixed_rows(ki, kj):
        """Channel mix (+bias) for one kernel tap -> (C_out*R, GW), f32 accumulation.

        The bias is folded in here: across the taps every output column has exactly
        one nonzero scatter entry, so adding bias[o] to every tap's rows contributes
        it exactly once per output element.
        """
        rows = []
        for o in range(C_out):
            base = ((ki * 2 + kj) * C_out + o) * C
            acc = p_ref[n_w + o] + p_ref[base] * xs[0]                # scalar * (R, GW)
            for c in range(1, C):
                acc = acc + p_ref[base + c] * xs[c]
            rows.append(acc)
        return jnp.concatenate(rows, axis=0)                          # (C_out*R, GW)

    if halved:
        # ki halves use (GW, 2*GW) matrices (half the MACs / VMEM of a (GW, 4*GW) form),
        # batched over the whole band (M = C_out*R); concat -> one wide lane-dense store.
        halves = []
        for ki in range(2):
            h = None
            for kj in range(2):
                y = mixed_rows(ki, kj).astype(s_dtype)
                t = jnp.dot(y, s_ref[kj], preferred_element_type=jnp.float32)
                h = t if h is None else h + t                         # (C_out*R, 2*GW)
            halves.append(h)
        band = jnp.concatenate(halves, axis=-1)                       # (C_out*R, 4*GW)
    else:
        # Grouped super-rows (small W): ki and kj targets interleave inside a super-row,
        # so the matrices cannot be ki-halved; G is chosen small so this stays HBM-bound.
        band = None
        for ki in range(2):
            for kj in range(2):
                y = mixed_rows(ki, kj).astype(s_dtype)
                t = jnp.dot(y, s_ref[2 * ki + kj], preferred_element_type=jnp.float32)
                band = t if band is None else band + t                # (C_out*R, 4*GW)

    o_ref[0] = band.reshape(C_out, R, 4 * GW).astype(o_ref.dtype)


def _interleave_matrices(w_dim, dtype):
    # Halved interleave: P[kj][j, 2j+kj] = 1, shape (2, W, 2W).
    j = jnp.arange(w_dim)
    return jnp.stack([jax.nn.one_hot(2 * j + kj, 2 * w_dim, dtype=dtype) for kj in (0, 1)])


def _grouped_scatter_matrices(g_rows, w_dim, dtype):
    # E[2ki+kj][g*W + j, g*4W + ki*2W + 2j + kj] = 1, shape (4, G*W, 4*G*W).
    q = jnp.arange(g_rows * w_dim)
    g, j = q // w_dim, q % w_dim
    mats = []
    for ki in (0, 1):
        for kj in (0, 1):
            cols = g * 4 * w_dim + ki * 2 * w_dim + 2 * j + kj
            mats.append(jax.nn.one_hot(cols, 4 * g_rows * w_dim, dtype=dtype))
    return jnp.stack(mats, axis=0)


def _choose_row_tile(n, c_in, c_out, h_g, gw, in_bytes, out_bytes, const_bytes,
                     vmem_limit_bytes, sublane):
    """Largest super-row band that fits VMEM (pipelined blocks double-buffered,
    constants counted once thanks to Buffered(1)), respecting the (8,128)/(16,128)
    block rule and keeping the grid >= 2 when possible."""
    budget = (3 * vmem_limit_bytes) // 4                  # ~25% headroom

    def fits(r):
        in_blk = c_in * r * gw * in_bytes
        out_blk = c_out * r * 4 * gw * out_bytes
        live = 4 * (c_in + 8 * c_out) * r * gw            # f32 intermediates in the body
        return 2 * in_blk + 2 * out_blk + const_bytes + live <= budget

    divs = [d for d in range(h_g, 0, -1)
            if h_g % d == 0 and (d % sublane == 0 or d == h_g)]
    r = next((d for d in divs if fits(d)), divs[-1])
    if n * (h_g // r) < 2:                                # let both v7x cores get work
        for d in divs:
            if d < r and n * (h_g // d) >= 2 and fits(d):
                r = d
                break
    return r


def dark_upsample2(x_nchw, weight, bias, *,
                   compute_dtype=jnp.bfloat16,
                   out_dtype=None,
                   row_tile=None,
                   vmem_limit_bytes=48 * 1024 * 1024):
    """ConvTranspose2d(C, C, kernel_size=2, stride=2) forward.

    x_nchw : (N, C, H, W)
    weight : (C_in, C_out, 2, 2)   (PyTorch ConvTranspose2d layout)
    bias   : (C_out,)
    returns: (N, C_out, 2H, 2W) in out_dtype (defaults to compute_dtype, i.e. bf16 for
             the performance default; pass compute_dtype=jnp.float32 for exact f32).
    """
    N, C, H, W = x_nchw.shape
    assert weight.shape[0] == C and weight.shape[2:] == (2, 2), weight.shape
    C_out = weight.shape[1]
    out_dtype = compute_dtype if out_dtype is None else out_dtype

    # Lane density: the ki-halved path needs the 4W output row width >= 128 lanes.
    # Otherwise fold G input rows into one super-row (free row-major reshape) so the
    # store width 4*G*W >= 128 while the scatter contraction length G*W stays small
    # enough (>=32, usually <64) to keep the kernel HBM-bound even on v5e.
    if 4 * W >= 128:
        G = 1
    else:
        cands = [g for g in range(1, H + 1) if H % g == 0 and 4 * g * W >= 128]
        G = min(cands) if cands else H
    GW = G * W
    H_g = H // G
    halved = (G == 1)

    # bf16 activations halve HBM read traffic (accumulation stays f32 in-kernel).
    x_g = x_nchw.reshape(N, C, H_g, GW).astype(compute_dtype)

    # Weights + bias as SMEM scalars (tiny): weight rows ordered (ki, kj, co), cols c.
    params = jnp.concatenate([
        jnp.transpose(weight, (2, 3, 1, 0)).reshape(-1),
        bias.reshape(-1),
    ]).astype(jnp.float32)

    # Scatter matrices: exact f32 when the caller wants an f32 result; otherwise the
    # compute dtype (0/1 entries are bf16-exact; only costs one rounding of the
    # pre-bias value, which is below the bf16 output rounding anyway).
    s_dtype = jnp.float32 if jnp.dtype(out_dtype) == jnp.dtype(jnp.float32) else compute_dtype
    if halved:
        s_mat = _interleave_matrices(W, s_dtype)               # (2, W, 2W)
    else:
        s_mat = _grouped_scatter_matrices(G, W, s_dtype)       # (4, GW, 4GW)

    in_bytes = jnp.dtype(compute_dtype).itemsize
    out_bytes = jnp.dtype(out_dtype).itemsize
    const_bytes = s_mat.size * s_mat.dtype.itemsize + params.size * 4
    sublane = 16 if min(in_bytes, out_bytes) < 4 else 8        # bf16 native tile is (16,128)
    if row_tile is None:
        R = _choose_row_tile(N, C, C_out, H_g, GW, in_bytes, out_bytes, const_bytes,
                             vmem_limit_bytes, sublane)
    else:
        R = row_tile
    assert H_g % R == 0 and (R % 8 == 0 or R == H_g), (H_g, R)

    grid = (N, H_g // R)

    out_packed = pl.pallas_call(
        _upsample_band_kernel,
        out_shape=jax.ShapeDtypeStruct((N, C_out, H_g, 4 * GW), out_dtype),
        grid_spec=pltpu.PrefetchScalarGridSpec(
            num_scalar_prefetch=0,
            grid=grid,
            in_specs=[
                # Streamed input band (double-buffered by the pipeline).
                pl.BlockSpec((1, C, R, GW), lambda n, t: (n, 0, t, 0)),
                # Weights + bias: scalar table in SMEM.
                pl.BlockSpec(memory_space=pltpu.MemorySpace.SMEM),
                # Constant scatter matrices: single buffer, constant index_map.
                pl.BlockSpec(s_mat.shape, lambda n, t: (0, 0, 0),
                             pipeline_mode=pl.Buffered(1)),
            ],
            out_specs=pl.BlockSpec((1, C_out, R, 4 * GW), lambda n, t: (n, 0, t, 0)),
        ),
        compiler_params=pltpu.CompilerParams(
            dimension_semantics=("parallel", "parallel"),
            vmem_limit_bytes=vmem_limit_bytes,
        ),
    )(x_g, params, s_mat)

    # (n, co, I, g*4W + ki*2W + 2j + kj) is already NCHW row-major:
    # flat index == (2*(I*G+g)+ki)*2W + (2j+kj), so this reshape is free (no HBM pass).
    return out_packed.reshape(N, C_out, 2 * H, 2 * W)


def _reference(x_nchw, weight, bias):
    # out[n, co, 2i+ki, 2j+kj] = bias[co] + sum_c x[n,c,i,j] * W[c,co,ki,kj]
    N, C, H, W = x_nchw.shape
    C_out = weight.shape[1]
    blk = jnp.einsum("ncij,cokl->noijkl", x_nchw, weight)      # (N, Co, H, W, 2, 2)
    blk = jnp.transpose(blk, (0, 1, 2, 4, 3, 5)).reshape(N, C_out, 2 * H, 2 * W)
    return blk + bias[None, :, None, None]


if __name__ == "__main__":
    key = jax.random.PRNGKey(0)
    k_x, k_w, k_b = jax.random.split(key, 3)

    N, C, H, W = 2, 4, 16, 16
    x = jax.random.normal(k_x, (N, C, H, W), dtype=jnp.float32)

    # Deterministic synthetic parameters (PyTorch shapes: W (Cin, Cout, 2, 2), b (Cout,))
    fan = C * 2 * 2
    bound = 1.0 / (fan ** 0.5)
    weight = jax.random.uniform(k_w, (C, C, 2, 2), jnp.float32, -bound, bound)
    bias = jax.random.uniform(k_b, (C,), jnp.float32, -bound, bound)

    ref = _reference(x, weight, bias)

    # 1) Exact path: f32 compute, f32 scatter, f32 out (grouped super-rows since W<32).
    out_f32 = jax.block_until_ready(
        dark_upsample2(x, weight, bias, compute_dtype=jnp.float32))
    assert out_f32.shape == (N, C, 2 * H, 2 * W), out_f32.shape
    assert jnp.allclose(out_f32, ref, atol=1e-5, rtol=1e-5)

    # 2) Performance default: bf16 in / bf16 out (dominant HBM write traffic halved).
    out_bf16 = jax.block_until_ready(dark_upsample2(x, weight, bias))
    assert out_bf16.shape == (N, C, 2 * H, 2 * W), out_bf16.shape
    assert out_bf16.dtype == jnp.bfloat16
    assert jnp.allclose(out_bf16.astype(jnp.float32), ref, atol=5e-2, rtol=5e-2)

    # 3) Wide-row shape exercising the ki-halved (W >= 32) interleave path, exact.
    N2, C2, H2, W2 = 1, 2, 8, 32
    x2 = jax.random.normal(k_x, (N2, C2, H2, W2), dtype=jnp.float32)
    w2 = jax.random.uniform(k_w, (C2, C2, 2, 2), jnp.float32, -0.3, 0.3)
    b2 = jax.random.uniform(k_b, (C2,), jnp.float32, -0.3, 0.3)
    ref2 = _reference(x2, w2, b2)
    out2 = jax.block_until_ready(
        dark_upsample2(x2, w2, b2, compute_dtype=jnp.float32))
    assert jnp.allclose(out2, ref2, atol=1e-5, rtol=1e-5)

    print("KERNEL_OK")
</pallas_src>

<mosaic_0001>
module attributes {stable_mosaic.version = 11 : i64} {
  func.func @_upsample_band_kernel(%arg0: i32, %arg1: i32, %arg2: memref<1x4x8x32xf32, #tpu.memory_space<vmem>>, %arg3: memref<68xf32, #tpu.memory_space<smem>>, %arg4: memref<4x32x128xf32, #tpu.memory_space<vmem>>, %arg5: memref<1x4x8x128xf32, #tpu.memory_space<vmem>>) attributes {dimension_semantics = [#tpu.dimension_semantics<parallel>, #tpu.dimension_semantics<parallel>], iteration_bounds = array<i64: 2, 1>, scalar_prefetch = 0 : i64, scratch_operands = 0 : i64, tpu.core_type = #tpu.core_type<tc>, window_params = [{transform_indices = @transform_0, window_bounds = array<i64: 1, 4, 8, 32>}, {transform_indices = @transform_1, window_bounds = array<i64: 68>}, {pipeline_mode = #tpu.pipeline_mode<synchronous>, transform_indices = @transform_2, window_bounds = array<i64: 4, 32, 128>}, {transform_indices = @transform_3, window_bounds = array<i64: 1, 4, 8, 128>}]} {
    %c0 = arith.constant 0 : index
    %c0_0 = arith.constant 0 : index
    %c0_1 = arith.constant 0 : index
    %c0_2 = arith.constant 0 : index
    %0 = vector.load %arg2[%c0, %c0_0, %c0_1, %c0_2] : memref<1x4x8x32xf32, #tpu.memory_space<vmem>>, vector<1x1x8x32xf32>
    %1 = vector.shape_cast %0 : vector<1x1x8x32xf32> to vector<8x32xf32>
    %c0_3 = arith.constant 0 : index
    %c1 = arith.constant 1 : index
    %c0_4 = arith.constant 0 : index
    %c0_5 = arith.constant 0 : index
    %2 = vector.load %arg2[%c0_3, %c1, %c0_4, %c0_5] : memref<1x4x8x32xf32, #tpu.memory_space<vmem>>, vector<1x1x8x32xf32>
    %3 = vector.shape_cast %2 : vector<1x1x8x32xf32> to vector<8x32xf32>
    %c0_6 = arith.constant 0 : index
    %c2 = arith.constant 2 : index
    %c0_7 = arith.constant 0 : index
    %c0_8 = arith.constant 0 : index
    %4 = vector.load %arg2[%c0_6, %c2, %c0_7, %c0_8] : memref<1x4x8x32xf32, #tpu.memory_space<vmem>>, vector<1x1x8x32xf32>
    %5 = vector.shape_cast %4 : vector<1x1x8x32xf32> to vector<8x32xf32>
    %c0_9 = arith.constant 0 : index
    %c3 = arith.constant 3 : index
    %c0_10 = arith.constant 0 : index
    %c0_11 = arith.constant 0 : index
    %6 = vector.load %arg2[%c0_9, %c3, %c0_10, %c0_11] : memref<1x4x8x32xf32, #tpu.memory_space<vmem>>, vector<1x1x8x32xf32>
    %7 = vector.shape_cast %6 : vector<1x1x8x32xf32> to vector<8x32xf32>
    %c64 = arith.constant 64 : index
    %8 = memref.load %arg3[%c64] : memref<68xf32, #tpu.memory_space<smem>>
    %c0_12 = arith.constant 0 : index
    %9 = memref.load %arg3[%c0_12] : memref<68xf32, #tpu.memory_space<smem>>
    %10 = vector.broadcast %9 : f32 to vector<8x32xf32>
    %11 = arith.mulf %10, %1 : vector<8x32xf32>
    %12 = vector.broadcast %8 : f32 to vector<8x32xf32>
    %13 = arith.addf %12, %11 : vector<8x32xf32>
    %c1_13 = arith.constant 1 : index
    %14 = memref.load %arg3[%c1_13] : memref<68xf32, #tpu.memory_space<smem>>
    %15 = vector.broadcast %14 : f32 to vector<8x32xf32>
    %16 = arith.mulf %15, %3 : vector<8x32xf32>
    %17 = arith.addf %13, %16 : vector<8x32xf32>
    %c2_14 = arith.constant 2 : index
    %18 = memref.load %arg3[%c2_14] : memref<68xf32, #tpu.memory_space<smem>>
    %19 = vector.broadcast %18 : f32 to vector<8x32xf32>
    %20 = arith.mulf %19, %5 : vector<8x32xf32>
    %21 = arith.addf %17, %20 : vector<8x32xf32>
    %c3_15 = arith.constant 3 : index
    %22 = memref.load %arg3[%c3_15] : memref<68xf32, #tpu.memory_space<smem>>
    %23 = vector.broadcast %22 : f32 to vector<8x32xf32>
    %24 = arith.mulf %23, %7 : vector<8x32xf32>
    %25 = arith.addf %21, %24 : vector<8x32xf32>
    %c65 = arith.constant 65 : index
    %26 = memref.load %arg3[%c65] : memref<68xf32, #tpu.memory_space<smem>>
    %c4 = arith.constant 4 : index
    %27 = memref.load %arg3[%c4] : memref<68xf32, #tpu.memory_space<smem>>
    %28 = vector.broadcast %27 : f32 to vector<8x32xf32>
    %29 = arith.mulf %28, %1 : vector<8x32xf32>
    %30 = vector.broadcast %26 : f32 to vector<8x32xf32>
    %31 = arith.addf %30, %29 : vector<8x32xf32>
    %c5 = arith.constant 5 : index
    %32 = memref.load %arg3[%c5] : memref<68xf32, #tpu.memory_space<smem>>
    %33 = vector.broadcast %32 : f32 to vector<8x32xf32>
    %34 = arith.mulf %33, %3 : vector<8x32xf32>
    %35 = arith.addf %31, %34 : vector<8x32xf32>
    %c6 = arith.constant 6 : index
    %36 = memref.load %arg3[%c6] : memref<68xf32, #tpu.memory_space<smem>>
    %37 = vector.broadcast %36 : f32 to vector<8x32xf32>
    %38 = arith.mulf %37, %5 : vector<8x32xf32>
    %39 = arith.addf %35, %38 : vector<8x32xf32>
    %c7 = arith.constant 7 : index
    %40 = memref.load %arg3[%c7] : memref<68xf32, #tpu.memory_space<smem>>
    %41 = vector.broadcast %40 : f32 to vector<8x32xf32>
    %42 = arith.mulf %41, %7 : vector<8x32xf32>
    %43 = arith.addf %39, %42 : vector<8x32xf32>
    %c66 = arith.constant 66 : index
    %44 = memref.load %arg3[%c66] : memref<68xf32, #tpu.memory_space<smem>>
    %c8 = arith.constant 8 : index
    %45 = memref.load %arg3[%c8] : memref<68xf32, #tpu.memory_space<smem>>
    %46 = vector.broadcast %45 : f32 to vector<8x32xf32>
    %47 = arith.mulf %46, %1 : vector<8x32xf32>
    %48 = vector.broadcast %44 : f32 to vector<8x32xf32>
    %49 = arith.addf %48, %47 : vector<8x32xf32>
    %c9 = arith.constant 9 : index
    %50 = memref.load %arg3[%c9] : memref<68xf32, #tpu.memory_space<smem>>
    %51 = vector.broadcast %50 : f32 to vector<8x32xf32>
    %52 = arith.mulf %51, %3 : vector<8x32xf32>
    %53 = arith.addf %49, %52 : vector<8x32xf32>
    %c10 = arith.constant 10 : index
    %54 = memref.load %arg3[%c10] : memref<68xf32, #tpu.memory_space<smem>>
    %55 = vector.broadcast %54 : f32 to vector<8x32xf32>
    %56 = arith.mulf %55, %5 : vector<8x32xf32>
    %57 = arith.addf %53, %56 : vector<8x32xf32>
    %c11 = arith.constant 11 : index
    %58 = memref.load %arg3[%c11] : memref<68xf32, #tpu.memory_space<smem>>
    %59 = vector.broadcast %58 : f32 to vector<8x32xf32>
    %60 = arith.mulf %59, %7 : vector<8x32xf32>
    %61 = arith.addf %57, %60 : vector<8x32xf32>
    %c67 = arith.constant 67 : index
    %62 = memref.load %arg3[%c67] : memref<68xf32, #tpu.memory_space<smem>>
    %c12 = arith.constant 12 : index
    %63 = memref.load %arg3[%c12] : memref<68xf32, #tpu.memory_space<smem>>
    %64 = vector.broadcast %63 : f32 to vector<8x32xf32>
    %65 = arith.mulf %64, %1 : vector<8x32xf32>
    %66 = vector.broadcast %62 : f32 to vector<8x32xf32>
    %67 = arith.addf %66, %65 : vector<8x32xf32>
    %c13 = arith.constant 13 : index
    %68 = memref.load %arg3[%c13] : memref<68xf32, #tpu.memory_space<smem>>
    %69 = vector.broadcast %68 : f32 to vector<8x32xf32>
    %70 = arith.mulf %69, %3 : vector<8x32xf32>
    %71 = arith.addf %67, %70 : vector<8x32xf32>
    %c14 = arith.constant 14 : index
    %72 = memref.load %arg3[%c14] : memref<68xf32, #tpu.memory_space<smem>>
    %73 = vector.broadcast %72 : f32 to vector<8x32xf32>
    %74 = arith.mulf %73, %5 : vector<8x32xf32>
    %75 = arith.addf %71, %74 : vector<8x32xf32>
    %c15 = arith.constant 15 : index
    %76 = memref.load %arg3[%c15] : memref<68xf32, #tpu.memory_space<smem>>
    %77 = vector.broadcast %76 : f32 to vector<8x32xf32>
    %78 = arith.mulf %77, %7 : vector<8x32xf32>
    %79 = arith.addf %75, %78 : vector<8x32xf32>
    %80 = tpu.concatenate %25, %43, %61, %79 in 0 : vector<8x32xf32>, vector<8x32xf32>, vector<8x32xf32>, vector<8x32xf32> -> vector<32x32xf32>
    %c0_16 = arith.constant 0 : index
    %c0_17 = arith.constant 0 : index
    %c0_18 = arith.constant 0 : index
    %81 = vector.load %arg4[%c0_16, %c0_17, %c0_18] : memref<4x32x128xf32, #tpu.memory_space<vmem>>, vector<1x32x128xf32>
    %82 = vector.shape_cast %81 : vector<1x32x128xf32> to vector<32x128xf32>
    %cst = arith.constant dense<0.000000e+00> : vector<32x128xf32>
    %83 = tpu.matmul %80, %82, %cst {dimension_numbers = #tpu.dot_dimension_numbers<[1], [0], [0], [1], [0, 0, 1, 1], [], []>} : vector<32x32xf32>, vector<32x128xf32>, vector<32x128xf32> -> vector<32x128xf32>
    %c64_19 = arith.constant 64 : index
    %84 = memref.load %arg3[%c64_19] : memref<68xf32, #tpu.memory_space<smem>>
    %c16 = arith.constant 16 : index
    %85 = memref.load %arg3[%c16] : memref<68xf32, #tpu.memory_space<smem>>
    %86 = vector.broadcast %85 : f32 to vector<8x32xf32>
    %87 = arith.mulf %86, %1 : vector<8x32xf32>
    %88 = vector.broadcast %84 : f32 to vector<8x32xf32>
    %89 = arith.addf %88, %87 : vector<8x32xf32>
    %c17 = arith.constant 17 : index
    %90 = memref.load %arg3[%c17] : memref<68xf32, #tpu.memory_space<smem>>
    %91 = vector.broadcast %90 : f32 to vector<8x32xf32>
    %92 = arith.mulf %91, %3 : vector<8x32xf32>
    %93 = arith.addf %89, %92 : vector<8x32xf32>
    %c18 = arith.constant 18 : index
    %94 = memref.load %arg3[%c18] : memref<68xf32, #tpu.memory_space<smem>>
    %95 = vector.broadcast %94 : f32 to vector<8x32xf32>
    %96 = arith.mulf %95, %5 : vector<8x32xf32>
    %97 = arith.addf %93, %96 : vector<8x32xf32>
    %c19 = arith.constant 19 : index
    %98 = memref.load %arg3[%c19] : memref<68xf32, #tpu.memory_space<smem>>
    %99 = vector.broadcast %98 : f32 to vector<8x32xf32>
    %100 = arith.mulf %99, %7 : vector<8x32xf32>
    %101 = arith.addf %97, %100 : vector<8x32xf32>
    %c65_20 = arith.constant 65 : index
    %102 = memref.load %arg3[%c65_20] : memref<68xf32, #tpu.memory_space<smem>>
    %c20 = arith.constant 20 : index
    %103 = memref.load %arg3[%c20] : memref<68xf32, #tpu.memory_space<smem>>
    %104 = vector.broadcast %103 : f32 to vector<8x32xf32>
    %105 = arith.mulf %104, %1 : vector<8x32xf32>
    %106 = vector.broadcast %102 : f32 to vector<8x32xf32>
    %107 = arith.addf %106, %105 : vector<8x32xf32>
    %c21 = arith.constant 21 : index
    %108 = memref.load %arg3[%c21] : memref<68xf32, #tpu.memory_space<smem>>
    %109 = vector.broadcast %108 : f32 to vector<8x32xf32>
    %110 = arith.mulf %109, %3 : vector<8x32xf32>
    %111 = arith.addf %107, %110 : vector<8x32xf32>
    %c22 = arith.constant 22 : index
    %112 = memref.load %arg3[%c22] : memref<68xf32, #tpu.memory_space<smem>>
    %113 = vector.broadcast %112 : f32 to vector<8x32xf32>
    %114 = arith.mulf %113, %5 : vector<8x32xf32>
    %115 = arith.addf %111, %114 : vector<8x32xf32>
    %c23 = arith.constant 23 : index
    %116 = memref.load %arg3[%c23] : memref<68xf32, #tpu.memory_space<smem>>
    %117 = vector.broadcast %116 : f32 to vector<8x32xf32>
    %118 = arith.mulf %117, %7 : vector<8x32xf32>
    %119 = arith.addf %115, %118 : vector<8x32xf32>
    %c66_21 = arith.constant 66 : index
    %120 = memref.load %arg3[%c66_21] : memref<68xf32, #tpu.memory_space<smem>>
    %c24 = arith.constant 24 : index
    %121 = memref.load %arg3[%c24] : memref<68xf32, #tpu.memory_space<smem>>
    %122 = vector.broadcast %121 : f32 to vector<8x32xf32>
    %123 = arith.mulf %122, %1 : vector<8x32xf32>
    %124 = vector.broadcast %120 : f32 to vector<8x32xf32>
    %125 = arith.addf %124, %123 : vector<8x32xf32>
    %c25 = arith.constant 25 : index
    %126 = memref.load %arg3[%c25] : memref<68xf32, #tpu.memory_space<smem>>
    %127 = vector.broadcast %126 : f32 to vector<8x32xf32>
    %128 = arith.mulf %127, %3 : vector<8x32xf32>
    %129 = arith.addf %125, %128 : vector<8x32xf32>
    %c26 = arith.constant 26 : index
    %130 = memref.load %arg3[%c26] : memref<68xf32, #tpu.memory_space<smem>>
    %131 = vector.broadcast %130 : f32 to vector<8x32xf32>
    %132 = arith.mulf %131, %5 : vector<8x32xf32>
    %133 = arith.addf %129, %132 : vector<8x32xf32>
    %c27 = arith.constant 27 : index
    %134 = memref.load %arg3[%c27] : memref<68xf32, #tpu.memory_space<smem>>
    %135 = vector.broadcast %134 : f32 to vector<8x32xf32>
    %136 = arith.mulf %135, %7 : vector<8x32xf32>
    %137 = arith.addf %133, %136 : vector<8x32xf32>
    %c67_22 = arith.constant 67 : index
    %138 = memref.load %arg3[%c67_22] : memref<68xf32, #tpu.memory_space<smem>>
    %c28 = arith.constant 28 : index
    %139 = memref.load %arg3[%c28] : memref<68xf32, #tpu.memory_space<smem>>
    %140 = vector.broadcast %139 : f32 to vector<8x32xf32>
    %141 = arith.mulf %140, %1 : vector<8x32xf32>
    %142 = vector.broadcast %138 : f32 to vector<8x32xf32>
    %143 = arith.addf %142, %141 : vector<8x32xf32>
    %c29 = arith.constant 29 : index
    %144 = memref.load %arg3[%c29] : memref<68xf32, #tpu.memory_space<smem>>
    %145 = vector.broadcast %144 : f32 to vector<8x32xf32>
    %146 = arith.mulf %145, %3 : vector<8x32xf32>
    %147 = arith.addf %143, %146 : vector<8x32xf32>
    %c30 = arith.constant 30 : index
    %148 = memref.load %arg3[%c30] : memref<68xf32, #tpu.memory_space<smem>>
    %149 = vector.broadcast %148 : f32 to vector<8x32xf32>
    %150 = arith.mulf %149, %5 : vector<8x32xf32>
    %151 = arith.addf %147, %150 : vector<8x32xf32>
    %c31 = arith.constant 31 : index
    %152 = memref.load %arg3[%c31] : memref<68xf32, #tpu.memory_space<smem>>
    %153 = vector.broadcast %152 : f32 to vector<8x32xf32>
    %154 = arith.mulf %153, %7 : vector<8x32xf32>
    %155 = arith.addf %151, %154 : vector<8x32xf32>
    %156 = tpu.concatenate %101, %119, %137, %155 in 0 : vector<8x32xf32>, vector<8x32xf32>, vector<8x32xf32>, vector<8x32xf32> -> vector<32x32xf32>
    %c1_23 = arith.constant 1 : index
    %c0_24 = arith.constant 0 : index
    %c0_25 = arith.constant 0 : index
    %157 = vector.load %arg4[%c1_23, %c0_24, %c0_25] : memref<4x32x128xf32, #tpu.memory_space<vmem>>, vector<1x32x128xf32>
    %158 = vector.shape_cast %157 : vector<1x32x128xf32> to vector<32x128xf32>
    %cst_26 = arith.constant dense<0.000000e+00> : vector<32x128xf32>
    %159 = tpu.matmul %156, %158, %cst_26 {dimension_numbers = #tpu.dot_dimension_numbers<[1], [0], [0], [1], [0, 0, 1, 1], [], []>} : vector<32x32xf32>, vector<32x128xf32>, vector<32x128xf32> -> vector<32x128xf32>
    %160 = arith.addf %83, %159 : vector<32x128xf32>
    %c64_27 = arith.constant 64 : index
    %161 = memref.load %arg3[%c64_27] : memref<68xf32, #tpu.memory_space<smem>>
    %c32 = arith.constant 32 : index
    %162 = memref.load %arg3[%c32] : memref<68xf32, #tpu.memory_space<smem>>
    %163 = vector.broadcast %162 : f32 to vector<8x32xf32>
    %164 = arith.mulf %163, %1 : vector<8x32xf32>
    %165 = vector.broadcast %161 : f32 to vector<8x32xf32>
    %166 = arith.addf %165, %164 : vector<8x32xf32>
    %c33 = arith.constant 33 : index
    %167 = memref.load %arg3[%c33] : memref<68xf32, #tpu.memory_space<smem>>
    %168 = vector.broadcast %167 : f32 to vector<8x32xf32>
    %169 = arith.mulf %168, %3 : vector<8x32xf32>
    %170 = arith.addf %166, %169 : vector<8x32xf32>
    %c34 = arith.constant 34 : index
    %171 = memref.load %arg3[%c34] : memref<68xf32, #tpu.memory_space<smem>>
    %172 = vector.broadcast %171 : f32 to vector<8x32xf32>
    %173 = arith.mulf %172, %5 : vector<8x32xf32>
    %174 = arith.addf %170, %173 : vector<8x32xf32>
    %c35 = arith.constant 35 : index
    %175 = memref.load %arg3[%c35] : memref<68xf32, #tpu.memory_space<smem>>
    %176 = vector.broadcast %175 : f32 to vector<8x32xf32>
    %177 = arith.mulf %176, %7 : vector<8x32xf32>
    %178 = arith.addf %174, %177 : vector<8x32xf32>
    %c65_28 = arith.constant 65 : index
    %179 = memref.load %arg3[%c65_28] : memref<68xf32, #tpu.memory_space<smem>>
    %c36 = arith.constant 36 : index
    %180 = memref.load %arg3[%c36] : memref<68xf32, #tpu.memory_space<smem>>
    %181 = vector.broadcast %180 : f32 to vector<8x32xf32>
    %182 = arith.mulf %181, %1 : vector<8x32xf32>
    %183 = vector.broadcast %179 : f32 to vector<8x32xf32>
    %184 = arith.addf %183, %182 : vector<8x32xf32>
    %c37 = arith.constant 37 : index
    %185 = memref.load %arg3[%c37] : memref<68xf32, #tpu.memory_space<smem>>
    %186 = vector.broadcast %185 : f32 to vector<8x32xf32>
    %187 = arith.mulf %186, %3 : vector<8x32xf32>
    %188 = arith.addf %184, %187 : vector<8x32xf32>
    %c38 = arith.constant 38 : index
    %189 = memref.load %arg3[%c38] : memref<68xf32, #tpu.memory_space<smem>>
    %190 = vector.broadcast %189 : f32 to vector<8x32xf32>
    %191 = arith.mulf %190, %5 : vector<8x32xf32>
    %192 = arith.addf %188, %191 : vector<8x32xf32>
    %c39 = arith.constant 39 : index
    %193 = memref.load %arg3[%c39] : memref<68xf32, #tpu.memory_space<smem>>
    %194 = vector.broadcast %193 : f32 to vector<8x32xf32>
    %195 = arith.mulf %194, %7 : vector<8x32xf32>
    %196 = arith.addf %192, %195 : vector<8x32xf32>
    %c66_29 = arith.constant 66 : index
    %197 = memref.load %arg3[%c66_29] : memref<68xf32, #tpu.memory_space<smem>>
    %c40 = arith.constant 40 : index
    %198 = memref.load %arg3[%c40] : memref<68xf32, #tpu.memory_space<smem>>
    %199 = vector.broadcast %198 : f32 to vector<8x32xf32>
    %200 = arith.mulf %199, %1 : vector<8x32xf32>
    %201 = vector.broadcast %197 : f32 to vector<8x32xf32>
    %202 = arith.addf %201, %200 : vector<8x32xf32>
    %c41 = arith.constant 41 : index
    %203 = memref.load %arg3[%c41] : memref<68xf32, #tpu.memory_space<smem>>
    %204 = vector.broadcast %203 : f32 to vector<8x32xf32>
    %205 = arith.mulf %204, %3 : vector<8x32xf32>
    %206 = arith.addf %202, %205 : vector<8x32xf32>
    %c42 = arith.constant 42 : index
    %207 = memref.load %arg3[%c42] : memref<68xf32, #tpu.memory_space<smem>>
    %208 = vector.broadcast %207 : f32 to vector<8x32xf32>
    %209 = arith.mulf %208, %5 : vector<8x32xf32>
    %210 = arith.addf %206, %209 : vector<8x32xf32>
    %c43 = arith.constant 43 : index
    %211 = memref.load %arg3[%c43] : memref<68xf32, #tpu.memory_space<smem>>
    %212 = vector.broadcast %211 : f32 to vector<8x32xf32>
    %213 = arith.mulf %212, %7 : vector<8x32xf32>
    %214 = arith.addf %210, %213 : vector<8x32xf32>
    %c67_30 = arith.constant 67 : index
    %215 = memref.load %arg3[%c67_30] : memref<68xf32, #tpu.memory_space<smem>>
    %c44 = arith.constant 44 : index
    %216 = memref.load %arg3[%c44] : memref<68xf32, #tpu.memory_space<smem>>
    %217 = vector.broadcast %216 : f32 to vector<8x32xf32>
    %218 = arith.mulf %217, %1 : vector<8x32xf32>
    %219 = vector.broadcast %215 : f32 to vector<8x32xf32>
    %220 = arith.addf %219, %218 : vector<8x32xf32>
    %c45 = arith.constant 45 : index
    %221 = memref.load %arg3[%c45] : memref<68xf32, #tpu.memory_space<smem>>
    %222 = vector.broadcast %221 : f32 to vector<8x32xf32>
    %223 = arith.mulf %222, %3 : vector<8x32xf32>
    %224 = arith.addf %220, %223 : vector<8x32xf32>
    %c46 = arith.constant 46 : index
    %225 = memref.load %arg3[%c46] : memref<68xf32, #tpu.memory_space<smem>>
    %226 = vector.broadcast %225 : f32 to vector<8x32xf32>
    %227 = arith.mulf %226, %5 : vector<8x32xf32>
    %228 = arith.addf %224, %227 : vector<8x32xf32>
    %c47 = arith.constant 47 : index
    %229 = memref.load %arg3[%c47] : memref<68xf32, #tpu.memory_space<smem>>
    %230 = vector.broadcast %229 : f32 to vector<8x32xf32>
    %231 = arith.mulf %230, %7 : vector<8x32xf32>
    %232 = arith.addf %228, %231 : vector<8x32xf32>
    %233 = tpu.concatenate %178, %196, %214, %232 in 0 : vector<8x32xf32>, vector<8x32xf32>, vector<8x32xf32>, vector<8x32xf32> -> vector<32x32xf32>
    %c2_31 = arith.constant 2 : index
    %c0_32 = arith.constant 0 : index
    %c0_33 = arith.constant 0 : index
    %234 = vector.load %arg4[%c2_31, %c0_32, %c0_33] : memref<4x32x128xf32, #tpu.memory_space<vmem>>, vector<1x32x128xf32>
    %235 = vector.shape_cast %234 : vector<1x32x128xf32> to vector<32x128xf32>
    %cst_34 = arith.constant dense<0.000000e+00> : vector<32x128xf32>
    %236 = tpu.matmul %233, %235, %cst_34 {dimension_numbers = #tpu.dot_dimension_numbers<[1], [0], [0], [1], [0, 0, 1, 1], [], []>} : vector<32x32xf32>, vector<32x128xf32>, vector<32x128xf32> -> vector<32x128xf32>
    %237 = arith.addf %160, %236 : vector<32x128xf32>
    %c64_35 = arith.constant 64 : index
    %238 = memref.load %arg3[%c64_35] : memref<68xf32, #tpu.memory_space<smem>>
    %c48 = arith.constant 48 : index
    %239 = memref.load %arg3[%c48] : memref<68xf32, #tpu.memory_space<smem>>
    %240 = vector.broadcast %239 : f32 to vector<8x32xf32>
    %241 = arith.mulf %240, %1 : vector<8x32xf32>
    %242 = vector.broadcast %238 : f32 to vector<8x32xf32>
    %243 = arith.addf %242, %241 : vector<8x32xf32>
    %c49 = arith.constant 49 : index
    %244 = memref.load %arg3[%c49] : memref<68xf32, #tpu.memory_space<smem>>
    %245 = vector.broadcast %244 : f32 to vector<8x32xf32>
    %246 = arith.mulf %245, %3 : vector<8x32xf32>
    %247 = arith.addf %243, %246 : vector<8x32xf32>
    %c50 = arith.constant 50 : index
    %248 = memref.load %arg3[%c50] : memref<68xf32, #tpu.memory_space<smem>>
    %249 = vector.broadcast %248 : f32 to vector<8x32xf32>
    %250 = arith.mulf %249, %5 : vector<8x32xf32>
    %251 = arith.addf %247, %250 : vector<8x32xf32>
    %c51 = arith.constant 51 : index
    %252 = memref.load %arg3[%c51] : memref<68xf32, #tpu.memory_space<smem>>
    %253 = vector.broadcast %252 : f32 to vector<8x32xf32>
    %254 = arith.mulf %253, %7 : vector<8x32xf32>
    %255 = arith.addf %251, %254 : vector<8x32xf32>
    %c65_36 = arith.constant 65 : index
    %256 = memref.load %arg3[%c65_36] : memref<68xf32, #tpu.memory_space<smem>>
    %c52 = arith.constant 52 : index
    %257 = memref.load %arg3[%c52] : memref<68xf32, #tpu.memory_space<smem>>
    %258 = vector.broadcast %257 : f32 to vector<8x32xf32>
    %259 = arith.mulf %258, %1 : vector<8x32xf32>
    %260 = vector.broadcast %256 : f32 to vector<8x32xf32>
    %261 = arith.addf %260, %259 : vector<8x32xf32>
    %c53 = arith.constant 53 : index
    %262 = memref.load %arg3[%c53] : memref<68xf32, #tpu.memory_space<smem>>
    %263 = vector.broadcast %262 : f32 to vector<8x32xf32>
    %264 = arith.mulf %263, %3 : vector<8x32xf32>
    %265 = arith.addf %261, %264 : vector<8x32xf32>
    %c54 = arith.constant 54 : index
    %266 = memref.load %arg3[%c54] : memref<68xf32, #tpu.memory_space<smem>>
    %267 = vector.broadcast %266 : f32 to vector<8x32xf32>
    %268 = arith.mulf %267, %5 : vector<8x32xf32>
    %269 = arith.addf %265, %268 : vector<8x32xf32>
    %c55 = arith.constant 55 : index
    %270 = memref.load %arg3[%c55] : memref<68xf32, #tpu.memory_space<smem>>
    %271 = vector.broadcast %270 : f32 to vector<8x32xf32>
    %272 = arith.mulf %271, %7 : vector<8x32xf32>
    %273 = arith.addf %269, %272 : vector<8x32xf32>
    %c66_37 = arith.constant 66 : index
    %274 = memref.load %arg3[%c66_37] : memref<68xf32, #tpu.memory_space<smem>>
    %c56 = arith.constant 56 : index
    %275 = memref.load %arg3[%c56] : memref<68xf32, #tpu.memory_space<smem>>
    %276 = vector.broadcast %275 : f32 to vector<8x32xf32>
    %277 = arith.mulf %276, %1 : vector<8x32xf32>
    %278 = vector.broadcast %274 : f32 to vector<8x32xf32>
    %279 = arith.addf %278, %277 : vector<8x32xf32>
    %c57 = arith.constant 57 : index
    %280 = memref.load %arg3[%c57] : memref<68xf32, #tpu.memory_space<smem>>
    %281 = vector.broadcast %280 : f32 to vector<8x32xf32>
    %282 = arith.mulf %281, %3 : vector<8x32xf32>
    %283 = arith.addf %279, %282 : vector<8x32xf32>
    %c58 = arith.constant 58 : index
    %284 = memref.load %arg3[%c58] : memref<68xf32, #tpu.memory_space<smem>>
    %285 = vector.broadcast %284 : f32 to vector<8x32xf32>
    %286 = arith.mulf %285, %5 : vector<8x32xf32>
    %287 = arith.addf %283, %286 : vector<8x32xf32>
    %c59 = arith.constant 59 : index
    %288 = memref.load %arg3[%c59] : memref<68xf32, #tpu.memory_space<smem>>
    %289 = vector.broadcast %288 : f32 to vector<8x32xf32>
    %290 = arith.mulf %289, %7 : vector<8x32xf32>
    %291 = arith.addf %287, %290 : vector<8x32xf32>
    %c67_38 = arith.constant 67 : index
    %292 = memref.load %arg3[%c67_38] : memref<68xf32, #tpu.memory_space<smem>>
    %c60 = arith.constant 60 : index
    %293 = memref.load %arg3[%c60] : memref<68xf32, #tpu.memory_space<smem>>
    %294 = vector.broadcast %293 : f32 to vector<8x32xf32>
    %295 = arith.mulf %294, %1 : vector<8x32xf32>
    %296 = vector.broadcast %292 : f32 to vector<8x32xf32>
    %297 = arith.addf %296, %295 : vector<8x32xf32>
    %c61 = arith.constant 61 : index
    %298 = memref.load %arg3[%c61] : memref<68xf32, #tpu.memory_space<smem>>
    %299 = vector.broadcast %298 : f32 to vector<8x32xf32>
    %300 = arith.mulf %299, %3 : vector<8x32xf32>
    %301 = arith.addf %297, %300 : vector<8x32xf32>
    %c62 = arith.constant 62 : index
    %302 = memref.load %arg3[%c62] : memref<68xf32, #tpu.memory_space<smem>>
    %303 = vector.broadcast %302 : f32 to vector<8x32xf32>
    %304 = arith.mulf %303, %5 : vector<8x32xf32>
    %305 = arith.addf %301, %304 : vector<8x32xf32>
    %c63 = arith.constant 63 : index
    %306 = memref.load %arg3[%c63] : memref<68xf32, #tpu.memory_space<smem>>
    %307 = vector.broadcast %306 : f32 to vector<8x32xf32>
    %308 = arith.mulf %307, %7 : vector<8x32xf32>
    %309 = arith.addf %305, %308 : vector<8x32xf32>
    %310 = tpu.concatenate %255, %273, %291, %309 in 0 : vector<8x32xf32>, vector<8x32xf32>, vector<8x32xf32>, vector<8x32xf32> -> vector<32x32xf32>
    %c3_39 = arith.constant 3 : index
    %c0_40 = arith.constant 0 : index
    %c0_41 = arith.constant 0 : index
    %311 = vector.load %arg4[%c3_39, %c0_40, %c0_41] : memref<4x32x128xf32, #tpu.memory_space<vmem>>, vector<1x32x128xf32>
    %312 = vector.shape_cast %311 : vector<1x32x128xf32> to vector<32x128xf32>
    %cst_42 = arith.constant dense<0.000000e+00> : vector<32x128xf32>
    %313 = tpu.matmul %310, %312, %cst_42 {dimension_numbers = #tpu.dot_dimension_numbers<[1], [0], [0], [1], [0, 0, 1, 1], [], []>} : vector<32x32xf32>, vector<32x128xf32>, vector<32x128xf32> -> vector<32x128xf32>
    %314 = arith.addf %237, %313 : vector<32x128xf32>
    %315 = vector.shape_cast %314 : vector<32x128xf32> to vector<4x8x128xf32>
    %c0_43 = arith.constant 0 : index
    %c0_44 = arith.constant 0 : index
    %c0_45 = arith.constant 0 : index
    %c0_46 = arith.constant 0 : index
    %316 = vector.load %arg5[%c0_43, %c0_44, %c0_45, %c0_46] : memref<1x4x8x128xf32, #tpu.memory_space<vmem>>, vector<1x4x8x128xf32>
    %317 = vector.shape_cast %316 : vector<1x4x8x128xf32> to vector<4x8x128xf32>
    %318 = vector.shape_cast %315 : vector<4x8x128xf32> to vector<1x4x8x128xf32>
    tpu.vector_store %arg5[%c0_43, %c0_44, %c0_45, %c0_46], %318 {strides = array<i32>} : memref<1x4x8x128xf32, #tpu.memory_space<vmem>>, vector<1x4x8x128xf32>,
    return
  }
  func.func @transform_0(%arg0: i32, %arg1: i32) -> (i32, i32, i32, i32) {
    %c0_i32 = arith.constant 0 : i32
    %c0_i32_0 = arith.constant 0 : i32
    %c0_i32_1 = arith.constant 0 : i32
    return %arg0, %c0_i32, %arg1, %c0_i32_0 : i32, i32, i32, i32
  }
  func.func @transform_1(%arg0: i32, %arg1: i32) -> i32 {
    %c0_i32 = arith.constant 0 : i32
    %c0_i32_0 = arith.constant 0 : i32
    return %c0_i32 : i32
  }
  func.func @transform_2(%arg0: i32, %arg1: i32) -> (i32, i32, i32) {
    %c0_i32 = arith.constant 0 : i32
    %c0_i32_0 = arith.constant 0 : i32
    %c0_i32_1 = arith.constant 0 : i32
    %c0_i32_2 = arith.constant 0 : i32
    return %c0_i32, %c0_i32_0, %c0_i32_1 : i32, i32, i32
  }
  func.func @transform_3(%arg0: i32, %arg1: i32) -> (i32, i32, i32, i32) {
    %c0_i32 = arith.constant 0 : i32
    %c0_i32_0 = arith.constant 0 : i32
    %c0_i32_1 = arith.constant 0 : i32
    return %arg0, %c0_i32, %arg1, %c0_i32_0 : i32, i32, i32, i32
  }
}

</mosaic_0001>

<llo_original>
// kernel: tpu_custom_call.1
$region0: #{tpu_custom_call.1}
  #allocation0 [shape = 'u32[]', space=smem, size = 0x4, offset = 0x4, fixed_abs, tag = 'smem constant byte address 0x4 - core index']
  #allocation1 [shape = 'u32[144,128]{1,0:T(1,128)}', space=vmem, size = 0x12000, scoped, tag = 'internal scratch']
  %s0 = inlined_call_operand.hbm [shape: f32[2,4,8,32], index: 0, kind: input, shape index: {}]
  %s1 = inlined_call_operand.vmem [shape: f32[68], index: 1, kind: input, shape index: {}]
  %s2 = inlined_call_operand.hbm [shape: f32[4,32,128], index: 2, kind: input, shape index: {}]
  %s3 = inlined_call_operand.hbm [shape: f32[2,4,8,128], index: 3, kind: output, shape index: {}]
  %s4 = sld [smem:[#allocation0]]
  $region57: #{tpu_custom_call.1} parent=0
    _
  %s6 = ssub.s32 1, %s4
  %s7 = scalar_select 0, %s6, %s4
  $region1: #{tpu_custom_call.1} parent=0
    #allocation2 [shape = 'u8[32768]{0}', space=vmem, size = 0x8000, scoped, tag = 'input window, operand 0']
    #allocation3 [shape = 's32[2]{0}', space=sflag, size = 0x8, scoped, tag = 'scoped memory for tpu_custom_call.1']
    #allocation4 [shape = 's32[2]{0}', space=sflag, size = 0x8, scoped, tag = 'scoped memory for tpu_custom_call.1']
    #allocation5 [shape = 's32[2]{0}', space=sflag, size = 0x8, scoped, tag = 'scoped memory for tpu_custom_call.1']
    #allocation6 [shape = 'u8[512]{0}', space=smem, size = 0x200, scoped, tag = 'input window, operand 1, single buffered']
    #allocation7 [shape = 'u8[65536]{0}', space=vmem, size = 0x10000, scoped, tag = 'input window, operand 2, single buffered']
    #allocation8 [shape = 's32[1]{0}', space=sflag, size = 0x4, scoped, tag = 'scoped memory for tpu_custom_call.1']
    #allocation9 [shape = 'u8[32768]{0}', space=vmem, size = 0x8000, scoped, tag = 'output window, operand 0']
    %8 = vsyncpa [#allocation3], 0
    %s9 = scalar_lea.sflag [#allocation3], 1
    %10 = vsyncpa %s9, 0
    %11 = vsyncpa [#allocation5], 0
    %12 = vsyncpa [#allocation8], 0
    %13 = vsyncpa [#allocation4], 0
    %s14 = scalar_lea.sflag [#allocation4], 1
    %15 = vsyncpa %s14, 0
    loop: start=0, step=1, limit=4
    $region2: #{tpu_custom_call.1} parent=1 // loop_pre_header
      _
    $region3: #{tpu_custom_call.1} parent=1 // loop_header
      %s17 = sphi 0, %s21
      %p18 = scmp.ge.s32.totalorder %s17, 4
      %s24 = sphi 0, %s36
      %s25 = sphi 0, %s32
      %s26 = sphi 0, %s24
      %s27 = sphi 0, %s25
      %s28 = sphi 0, %s26
      %s29 = sphi 0, %s27
      %s41 = sphi 0, %s43
      %s44 = sphi 0, %s41
      %s45 = sphi 0, %s44
      %s61 = sphi 0, %s45
      %s65 = sphi 0, %s65
      %s67 = sphi 0, %s65
      %s68 = sphi 0, %s67
      %s82 = sphi 0, %s68
      %s86 = sphi 0, %s86
      %s88 = sphi 0, %s86
      %s89 = sphi 0, %s88
      %s103 = sphi 0, %s89
      %s111 = sphi 0, %s113
      %s114 = sphi 0, %s111
      %s115 = sphi 0, %s114
      %s131 = sphi 0, %s115
    $region4: #{tpu_custom_call.1} parent=1 // loop_header_branch
      %20 = sbr.rel (%p18) target = $region8
    $region5: #{tpu_custom_call.1} parent=1 // loop_body
      %s22 = ssub.s32 %s17, 1
      %s23 = ssub.s32 %s17, 2
      %s30 = sadd.s32 1, %s25
      %p31 = scmp.ge.s32.totalorder %s30, 1
      %s32 = scalar_select %p31, 0, %s30
      %s33 = sadd.s32 1, %s24
      %s34 = scalar_select %p31, %s33, %s24
      %p35 = scmp.ge.s32.totalorder %s34, 2
      %s36 = scalar_select %p35, 0, %s34
      %s37 = ssub.s32 %s24, %s36
      %s38 = ssub.s32 %s25, %s32
      %s39 = sor.u32 %s37, %s38
      %p40 = scmp.eq.s32.totalorder %s39, 0
      %s42 = sadd.s32 %s41, 1
      %s43 = scalar_select %p40, %s41, %s42
      %p46 = pneg %p40
      %p47 = scmp.eq.s32.totalorder %s17, 1
      %p48 = por %p46, %p47
      %p49 = scmp.ne.s32.totalorder %s41, %s44
      %p50 = scmp.eq.s32.totalorder %s17, 0
      %p51 = por %p49, %p50
      %p52 = scmp.ne.s32.totalorder %s41, %s44
      %p53 = scmp.eq.s32.totalorder %s22, 1
      %p54 = por %p52, %p53
      %p55 = scmp.ne.s32.totalorder %s44, %s45
      %p56 = scmp.eq.s32.totalorder %s22, 0
      %p57 = por %p55, %p56
      %p58 = scmp.ne.s32.totalorder %s44, %s45
      %p59 = scmp.eq.s32.totalorder %s23, 1
      %p60 = por %p58, %p59
      %p62 = scmp.ne.s32.totalorder %s45, %s61
      %p63 = scmp.eq.s32.totalorder %s23, 0
      %p64 = por %p62, %p63
      %s66 = sadd.s32 %s65, 1
      %p69 = scmp.eq.s32.totalorder %s17, 1
      %p70 = scmp.ne.s32.totalorder %s65, %s67
      %p71 = scmp.eq.s32.totalorder %s17, 0
      %p72 = por %p70, %p71
      %p73 = scmp.ne.s32.totalorder %s65, %s67
      %p74 = scmp.eq.s32.totalorder %s22, 1
      %p75 = por %p73, %p74
      %p76 = scmp.ne.s32.totalorder %s67, %s68
      %p77 = scmp.eq.s32.totalorder %s22, 0
      %p78 = por %p76, %p77
      %p79 = scmp.ne.s32.totalorder %s67, %s68
      %p80 = scmp.eq.s32.totalorder %s23, 1
      %p81 = por %p79, %p80
      %p83 = scmp.ne.s32.totalorder %s68, %s82
      %p84 = scmp.eq.s32.totalorder %s23, 0
      %p85 = por %p83, %p84
      %s87 = sadd.s32 %s86, 1
      %p90 = scmp.eq.s32.totalorder %s17, 1
      %p91 = scmp.ne.s32.totalorder %s86, %s88
      %p92 = scmp.eq.s32.totalorder %s17, 0
      %p93 = por %p91, %p92
      %p94 = scmp.ne.s32.totalorder %s86, %s88
      %p95 = scmp.eq.s32.totalorder %s22, 1
      %p96 = por %p94, %p95
      %p97 = scmp.ne.s32.totalorder %s88, %s89
      %p98 = scmp.eq.s32.totalorder %s22, 0
      %p99 = por %p97, %p98
      %p100 = scmp.ne.s32.totalorder %s88, %s89
      %p101 = scmp.eq.s32.totalorder %s23, 1
      %p102 = por %p100, %p101
      %p104 = scmp.ne.s32.totalorder %s89, %s103
      %p105 = scmp.eq.s32.totalorder %s23, 0
      %p106 = por %p104, %p105
      %s107 = ssub.s32 %s24, %s36
      %s108 = ssub.s32 %s25, %s32
      %s109 = sor.u32 %s107, %s108
      %p110 = scmp.eq.s32.totalorder %s109, 0
      %s112 = sadd.s32 %s111, 1
      %s113 = scalar_select %p110, %s111, %s112
      %p116 = pneg %p110
      %p117 = scmp.eq.s32.totalorder %s17, 1
      %p118 = por %p116, %p117
      %p119 = scmp.ne.s32.totalorder %s111, %s114
      %p120 = scmp.eq.s32.totalorder %s17, 0
      %p121 = por %p119, %p120
      %p122 = scmp.ne.s32.totalorder %s111, %s114
      %p123 = scmp.eq.s32.totalorder %s22, 1
      %p124 = por %p122, %p123
      %p125 = scmp.ne.s32.totalorder %s114, %s115
      %p126 = scmp.eq.s32.totalorder %s22, 0
      %p127 = por %p125, %p126
      %p128 = scmp.ne.s32.totalorder %s114, %s115
      %p129 = scmp.eq.s32.totalorder %s23, 1
      %p130 = por %p128, %p129
      %p132 = scmp.ne.s32.totalorder %s115, %s131
      %p133 = scmp.eq.s32.totalorder %s23, 0
      %p134 = por %p132, %p133
      %p135 = scmp.le.s32.totalorder 1, %s17
      %p136 = scmp.lt.s32.totalorder %s17, 3
      %p137 = pnand %p135, %p136
      %p138 = pneg %p137
      // Predicated region
      $region9: #{tpu_custom_call.1} parent=5 // pred_check
        _
      $region10: #{tpu_custom_call.1} parent=5 // pred_check_branch
        %140 = sbr.rel (%p137) target = $region12
      $region11: #{tpu_custom_call.1} parent=5 // pred_region
        %s141 = ssub.s32 %s17, 1
        // Predicated region
        $region13: #{tpu_custom_call.1} parent=11 // pred_check
          %p142 = pneg %p78
        $region14: #{tpu_custom_call.1} parent=11 // pred_check_branch
          %144 = sbr.rel (%p142) target = $region16
        $region15: #{tpu_custom_call.1} parent=11 // pred_region
          %s146 = ssub.s32 16, 16
          %147 = vsyncadd [#allocation5], %s146
          %s149 = sshll.u32 %s1, 4
          %s150 = int_to_ptr.vmem [resolvable:$true] %s149
          %152 = dma.vmem_to_smem %s150, 16, [#allocation6], [#allocation5]
        $region16: #{tpu_custom_call.1} parent=11 // pred_fallthru
          _
        // Predicated region
        $region17: #{tpu_custom_call.1} parent=11 // pred_check
          %p153 = pneg %p99
        $region18: #{tpu_custom_call.1} parent=11 // pred_check_branch
          %155 = sbr.rel (%p153) target = $region20
        $region19: #{tpu_custom_call.1} parent=11 // pred_region
          %s157 = ssub.s32 2048, 2048
          %158 = vsyncadd [#allocation8], %s157
          %s159 = sshll.u32 [#allocation7], 4
          %s160 = int_to_ptr.vmem [resolvable:$true] %s159
          %165 = dma.hbm_to_vmem [thread:$0]  %s2, 2048, %s160, [#allocation8], 128, 128, 8
        $region20: #{tpu_custom_call.1} parent=11 // pred_fallthru
          _
      $region12: #{tpu_custom_call.1} parent=5 // pred_fallthru
        _
      %p166 = scmp.lt.s32.totalorder %s17, 2
      // Predicated region
      $region21: #{tpu_custom_call.1} parent=5 // pred_check
        %p167 = pneg %p166
      $region22: #{tpu_custom_call.1} parent=5 // pred_check_branch
        %169 = sbr.rel (%p167) target = $region24
      $region23: #{tpu_custom_call.1} parent=5 // pred_region
        // Predicated region
        $region25: #{tpu_custom_call.1} parent=23 // pred_check
          %p170 = pneg %p51
        $region26: #{tpu_custom_call.1} parent=23 // pred_check_branch
          %172 = sbr.rel (%p170) target = $region28
        $region27: #{tpu_custom_call.1} parent=23 // pred_region
          %s173 = sand.u32 %s41, 1
          %s174 = scalar_lea.sflag [#allocation3], %s173
          %s175 = sand.u32 %s41, 1
          %s176 = smul.addr %s175, 32
          %s177 = scalar_lea.vmem [#allocation2], %s176
          %s179 = ssub.s32 512, 512
          %180 = vsyncadd %s174, %s179
          %s181 = smul.addr %s24, 4
          %s182 = sadd.s32 %s25, %s181
          %s183 = smul.addr %s182, 128
          %s184 = scalar_lea.hbm %s0, %s183
          %s185 = sshll.u32 %s177, 4
          %s186 = int_to_ptr.vmem [resolvable:$true] %s185
          %191 = dma.hbm_to_vmem [thread:$0]  %s184, 512, %s186, %s174, 128, 128, 8
        $region28: #{tpu_custom_call.1} parent=23 // pred_fallthru
          _
      $region24: #{tpu_custom_call.1} parent=5 // pred_fallthru
        _
      %p192 = scmp.le.s32.totalorder 1, %s17
      %p193 = scmp.lt.s32.totalorder %s17, 3
      %p194 = pnand %p192, %p193
      %p195 = pneg %p194
      // Predicated region
      $region29: #{tpu_custom_call.1} parent=5 // pred_check
        _
      $region30: #{tpu_custom_call.1} parent=5 // pred_check_branch
        %197 = sbr.rel (%p194) target = $region32
      $region31: #{tpu_custom_call.1} parent=5 // pred_region
        %s198 = ssub.s32 %s17, 1
        %s199 = sand.u32 %s44, 1
        %s200 = scalar_lea.sflag [#allocation3], %s199
        %s201 = sand.u32 %s44, 1
        %s202 = smul.addr %s201, 32
        %s203 = scalar_lea.vmem [#allocation2], %s202
        // Predicated region
        $region33: #{tpu_custom_call.1} parent=31 // pred_check
          %p204 = pneg %p57
        $region34: #{tpu_custom_call.1} parent=31 // pred_check_branch
          %206 = sbr.rel (%p204) target = $region36
        $region35: #{tpu_custom_call.1} parent=31 // pred_region
          %207 = dma.done %s200, 512
        $region36: #{tpu_custom_call.1} parent=31 // pred_fallthru
          _
        // Predicated region
        $region37: #{tpu_custom_call.1} parent=31 // pred_check
          %p208 = pneg %p78
        $region38: #{tpu_custom_call.1} parent=31 // pred_check_branch
          %210 = sbr.rel (%p208) target = $region40
        $region39: #{tpu_custom_call.1} parent=31 // pred_region
          %211 = dma.done [#allocation5], 16
        $region40: #{tpu_custom_call.1} parent=31 // pred_fallthru
          _
        // Predicated region
        $region41: #{tpu_custom_call.1} parent=31 // pred_check
          %p212 = pneg %p99
        $region42: #{tpu_custom_call.1} parent=31 // pred_check_branch
          %214 = sbr.rel (%p212) target = $region44
        $region43: #{tpu_custom_call.1} parent=31 // pred_region
          %215 = dma.done [#allocation8], 2048
        $region44: #{tpu_custom_call.1} parent=31 // pred_fallthru
          _
        %216 = sfence
        %s217 = sand.u32 %s44, 1
        %s218 = scalar_lea.sflag [#allocation3], %s217
        %s219 = sand.u32 %s44, 1
        %s220 = smul.addr %s219, 32
        %s221 = scalar_lea.vmem [#allocation2], %s220
        %p222 = pneg %p57
        %p223 = pneg %p54
        %p224 = pneg %p78
        %p225 = pneg %p75
        %p226 = pneg %p99
        %p227 = pneg %p96
        %p228 = pneg %p127
        %p229 = pneg %p124
        %s230 = sand.u32 %s114, 1
        %s231 = scalar_lea.sflag [#allocation4], %s230
        %s232 = sand.u32 %s114, 1
        %s233 = smul.addr %s232, 32
        %s234 = scalar_lea.vmem [#allocation9], %s233
        %v235 = vld [vmem:[%s203] sm:$0xff]
        %s236 = scalar_lea.vmem %s203, 8 [#allocation2]
        %v237 = vld [vmem:[%s236] sm:$0xff]
        %s238 = scalar_lea.vmem %s203, 16 [#allocation2]
        %v239 = vld [vmem:[%s238] sm:$0xff]
        %s240 = scalar_lea.vmem %s203, 24 [#allocation2]
        %v241 = vld [vmem:[%s240] sm:$0xff]
        %s242 = sld [smem:[#allocation6 + $0x40]]
        %s243 = sld [smem:[#allocation6]]
        %v244 = vstv %s243
        %v245 = vmul.f32 %v244, %v235
        %v246 = vstv %s242
        %v247 = vadd.f32 %v246, %v245
        %s248 = sld [smem:[#allocation6 + $0x1]]
        %v249 = vstv %s248
        %v250 = vmul.f32 %v249, %v237
        %v251 = vadd.f32 %v247, %v250
        %s252 = sld [smem:[#allocation6 + $0x2]]
        %v253 = vstv %s252
        %v254 = vmul.f32 %v253, %v239
        %v255 = vadd.f32 %v251, %v254
        %s256 = sld [smem:[#allocation6 + $0x3]]
        %v257 = vstv %s256
        %v258 = vmul.f32 %v257, %v241
        %v259 = vadd.f32 %v255, %v258
        %s260 = sld [smem:[#allocation6 + $0x41]]
        %s261 = sld [smem:[#allocation6 + $0x4]]
        %v262 = vstv %s261
        %v263 = vmul.f32 %v262, %v235
        %v264 = vstv %s260
        %v265 = vadd.f32 %v264, %v263
        %s266 = sld [smem:[#allocation6 + $0x5]]
        %v267 = vstv %s266
        %v268 = vmul.f32 %v267, %v237
        %v269 = vadd.f32 %v265, %v268
        %s270 = sld [smem:[#allocation6 + $0x6]]
        %v271 = vstv %s270
        %v272 = vmul.f32 %v271, %v239
        %v273 = vadd.f32 %v269, %v272
        %s274 = sld [smem:[#allocation6 + $0x7]]
        %v275 = vstv %s274
        %v276 = vmul.f32 %v275, %v241
        %v277 = vadd.f32 %v273, %v276
        %s278 = sld [smem:[#allocation6 + $0x42]]
        %s279 = sld [smem:[#allocation6 + $0x8]]
        %v280 = vstv %s279
        %v281 = vmul.f32 %v280, %v235
        %v282 = vstv %s278
        %v283 = vadd.f32 %v282, %v281
        %s284 = sld [smem:[#allocation6 + $0x9]]
        %v285 = vstv %s284
        %v286 = vmul.f32 %v285, %v237
        %v287 = vadd.f32 %v283, %v286
        %s288 = sld [smem:[#allocation6 + $0xa]]
        %v289 = vstv %s288
        %v290 = vmul.f32 %v289, %v239
        %v291 = vadd.f32 %v287, %v290
        %s292 = sld [smem:[#allocation6 + $0xb]]
        %v293 = vstv %s292
        %v294 = vmul.f32 %v293, %v241
        %v295 = vadd.f32 %v291, %v294
        %s296 = sld [smem:[#allocation6 + $0x43]]
        %s297 = sld [smem:[#allocation6 + $0xc]]
        %v298 = vstv %s297
        %v299 = vmul.f32 %v298, %v235
        %v300 = vstv %s296
        %v301 = vadd.f32 %v300, %v299
        %s302 = sld [smem:[#allocation6 + $0xd]]
        %v303 = vstv %s302
        %v304 = vmul.f32 %v303, %v237
        %v305 = vadd.f32 %v301, %v304
        %s306 = sld [smem:[#allocation6 + $0xe]]
        %v307 = vstv %s306
        %v308 = vmul.f32 %v307, %v239
        %v309 = vadd.f32 %v305, %v308
        %s310 = sld [smem:[#allocation6 + $0xf]]
        %v311 = vstv %s310
        %v312 = vmul.f32 %v311, %v241
        %v313 = vadd.f32 %v309, %v312
        %v314 = vld [vmem:[#allocation7] sm:$0xff]
        %v315 = vld [vmem:[#allocation7 + $0x8] sm:$0xff]
        %v316 = vld [vmem:[#allocation7 + $0x10] sm:$0xff]
        %v317 = vld [vmem:[#allocation7 + $0x18] sm:$0xff]
        %s318 = sld [smem:[#allocation6 + $0x10]]
        %v319 = vstv %s318
        %v320 = vmul.f32 %v319, %v235
        %v321 = vadd.f32 %v246, %v320
        %s322 = sld [smem:[#allocation6 + $0x11]]
        %v323 = vstv %s322
        %v324 = vmul.f32 %v323, %v237
        %v325 = vadd.f32 %v321, %v324
        %s326 = sld [smem:[#allocation6 + $0x12]]
        %v327 = vstv %s326
        %v328 = vmul.f32 %v327, %v239
        %v329 = vadd.f32 %v325, %v328
        %s330 = sld [smem:[#allocation6 + $0x13]]
        %v331 = vstv %s330
        %v332 = vmul.f32 %v331, %v241
        %v333 = vadd.f32 %v329, %v332
        %s334 = sld [smem:[#allocation6 + $0x14]]
        %v335 = vstv %s334
        %v336 = vmul.f32 %v335, %v235
        %v337 = vadd.f32 %v264, %v336
        %s338 = sld [smem:[#allocation6 + $0x15]]
        %v339 = vstv %s338
        %v340 = vmul.f32 %v339, %v237
        %v341 = vadd.f32 %v337, %v340
        %s342 = sld [smem:[#allocation6 + $0x16]]
        %v343 = vstv %s342
        %v344 = vmul.f32 %v343, %v239
        %v345 = vadd.f32 %v341, %v344
        %s346 = sld [smem:[#allocation6 + $0x17]]
        %v347 = vstv %s346
        %v348 = vmul.f32 %v347, %v241
        %v349 = vadd.f32 %v345, %v348
        %s350 = sld [smem:[#allocation6 + $0x18]]
        %v351 = vstv %s350
        %v352 = vmul.f32 %v351, %v235
        %v353 = vadd.f32 %v282, %v352
        %s354 = sld [smem:[#allocation6 + $0x19]]
        %v355 = vstv %s354
        %v356 = vmul.f32 %v355, %v237
        %v357 = vadd.f32 %v353, %v356
        %s358 = sld [smem:[#allocation6 + $0x1a]]
        %v359 = vstv %s358
        %v360 = vmul.f32 %v359, %v239
        %v361 = vadd.f32 %v357, %v360
        %s362 = sld [smem:[#allocation6 + $0x1b]]
        %v363 = vstv %s362
        %v364 = vmul.f32 %v363, %v241
        %v365 = vadd.f32 %v361, %v364
        %s366 = sld [smem:[#allocation6 + $0x1c]]
        %v367 = vstv %s366
        %v368 = vmul.f32 %v367, %v235
        %v369 = vadd.f32 %v300, %v368
        %s370 = sld [smem:[#allocation6 + $0x1d]]
        %v371 = vstv %s370
        %v372 = vmul.f32 %v371, %v237
        %v373 = vadd.f32 %v369, %v372
        %s374 = sld [smem:[#allocation6 + $0x1e]]
        %v375 = vstv %s374
        %v376 = vmul.f32 %v375, %v239
        %v377 = vadd.f32 %v373, %v376
        %s378 = sld [smem:[#allocation6 + $0x1f]]
        %v379 = vstv %s378
        %v380 = vmul.f32 %v379, %v241
        %v381 = vadd.f32 %v377, %v380
        %s382 = scalar_lea.vmem [#allocation7], 32
        %v383 = vld [vmem:[%s382] sm:$0xff]
        %v384 = vld [vmem:[%s382 + $0x8] sm:$0xff]
        %v385 = vld [vmem:[%s382 + $0x10] sm:$0xff]
        %v386 = vld [vmem:[%s382 + $0x18] sm:$0xff]
        %vm387 = vcmask 261120
        %v389 = vsel %vm387, %v333, 0
        %v392 = vsel %vm387, %v349, 0
        %v395 = vsel %vm387, %v365, 0
        %v398 = vsel %vm387, %v381, 0
        %400 = vmatprep.subr.mxu0 0.0
        %401 = vmatpush1.msra.mxu0 %v383
        %402 = vmatprep.subr.mxu0 0.0
        %403 = vmatpush1.msra.mxu0 %v384
        %404 = vmatprep.subr.mxu0 0.0
        %405 = vmatpush1.msra.mxu0 %v385
        %406 = vmatprep.subr.mxu0 0.0
        %407 = vmatpush1.msra.mxu0 %v386
        %408 = vmatprep.subr.mxu0 0.0
        %409 = vmatpush1.msra.mxu0 0.0
        %410 = vmatprep.subr.mxu0 0.0
        %411 = vmatpush1.msra.mxu0 0.0
        %412 = vmatprep.subr.mxu0 0.0
        %413 = vmatpush1.msra.mxu0 0.0
        %414 = vmatprep.subr.mxu0 0.0
        %415 = vmatpush1.msra.mxu0 0.0
        %416 = vmatprep.subr.mxu0 0.0
        %417 = vmatpush1.msra.mxu0 0.0
        %418 = vmatprep.subr.mxu0 0.0
        %419 = vmatpush1.msra.mxu0 0.0
        %420 = vmatprep.subr.mxu0 0.0
        %421 = vmatpush1.msra.mxu0 0.0
        %422 = vmatprep.subr.mxu0 0.0
        %423 = vmatpush1.msra.mxu0 0.0
        %424 = vmatprep.subr.mxu0 0.0
        %425 = vmatpush1.msra.mxu0 0.0
        %426 = vmatprep.subr.mxu0 0.0
        %427 = vmatpush1.msra.mxu0 0.0
        %428 = vmatprep.subr.mxu0 0.0
        %429 = vmatpush1.msra.mxu0 0.0
        %430 = vmatprep.subr.mxu0 0.0
        %431 = vmatpush1.msra.mxu0 0.0
        %432 = vmatprep.subr.mxu0 0.0
        %433 = vmatpush1.msra.mxu0 0.0
        %434 = vmatprep.subr.mxu0 0.0
        %435 = vmatpush1.msra.mxu0 0.0
        %436 = vmatprep.subr.mxu0 0.0
        %437 = vmatpush1.msra.mxu0 0.0
        %438 = vmatprep.subr.mxu0 0.0
        %439 = vmatpush1.msra.mxu0 0.0
        %440 = vmatprep.subr.mxu0 0.0
        %441 = vmatpush1.msra.mxu0 0.0
        %442 = vmatprep.subr.mxu0 0.0
        %443 = vmatpush1.msra.mxu0 0.0
        %444 = vmatprep.subr.mxu0 0.0
        %445 = vmatpush1.msra.mxu0 0.0
        %446 = vmatprep.subr.mxu0 0.0
        %447 = vmatpush1.msra.mxu0 0.0
        %448 = vmatprep.subr.mxu0 0.0
        %449 = vmatpush1.msra.mxu0 0.0
        %450 = vmatprep.subr.mxu0 0.0
        %451 = vmatpush1.msra.mxu0 0.0
        %452 = vmatprep.subr.mxu0 0.0
        %453 = vmatpush1.msra.mxu0 0.0
        %454 = vmatprep.subr.mxu0 0.0
        %455 = vmatpush1.msra.mxu0 0.0
        %456 = vmatprep.subr.mxu0 0.0
        %457 = vmatpush1.msra.mxu0 0.0
        %458 = vmatprep.subr.mxu0 0.0
        %459 = vmatpush1.msra.mxu0 0.0
        %460 = vmatprep.subr.mxu0 0.0
        %461 = vmatpush1.msra.mxu0 0.0
        %462 = vmatprep.subr.mxu0 0.0
        %463 = vmatpush1.msra.mxu0 0.0
        %464 = vmatprep.mubr.f32.mxu0 0.0
        %465 = vmatmul.mubr.f32.gmra.mrb[0].mxu0 %v389
        %v466 = vpop.f32.mrb[0].mxu0
        %v467 = vadd.f32 0.0, %v466
        %v468 = vpop.f32.mrb[0].mxu0
        %469 = vmatprep.mubr.f32.mxu0 0.0
        %470 = vmatmul.mubr.f32.gmra.mrb[0].mxu0 %v392
        %v471 = vpop.f32.mrb[0].mxu0
        %v472 = vadd.f32 0.0, %v471
        %v473 = vpop.f32.mrb[0].mxu0
        %474 = vmatprep.mubr.f32.mxu0 0.0
        %475 = vmatmul.mubr.f32.gmra.mrb[0].mxu0 %v395
        %v476 = vpop.f32.mrb[0].mxu0
        %v477 = vadd.f32 0.0, %v476
        %v478 = vpop.f32.mrb[0].mxu0
        %479 = vmatprep.mubr.f32.mxu0 0.0
        %480 = vmatmul.mubr.f32.gmra.mrb[0].mxu0 %v398
        %v481 = vpop.f32.mrb[0].mxu0
        %v482 = vadd.f32 0.0, %v481
        %v483 = vpop.f32.mrb[0].mxu0
        %484 = vdwg.mxu0
        %v486 = vsel %vm387, %v259, 0
        %v489 = vsel %vm387, %v277, 0
        %v492 = vsel %vm387, %v295, 0
        %v495 = vsel %vm387, %v313, 0
        %497 = vmatprep.subr.mxu0 0.0
        %498 = vmatpush1.msra.mxu0 %v314
        %499 = vmatprep.subr.mxu0 0.0
        %500 = vmatpush1.msra.mxu0 %v315
        %501 = vmatprep.subr.mxu0 0.0
        %502 = vmatpush1.msra.mxu0 %v316
        %503 = vmatprep.subr.mxu0 0.0
        %504 = vmatpush1.msra.mxu0 %v317
        %505 = vmatprep.subr.mxu0 0.0
        %506 = vmatpush1.msra.mxu0 0.0
        %507 = vmatprep.subr.mxu0 0.0
        %508 = vmatpush1.msra.mxu0 0.0
        %509 = vmatprep.subr.mxu0 0.0
        %510 = vmatpush1.msra.mxu0 0.0
        %511 = vmatprep.subr.mxu0 0.0
        %512 = vmatpush1.msra.mxu0 0.0
        %513 = vmatprep.subr.mxu0 0.0
        %514 = vmatpush1.msra.mxu0 0.0
        %515 = vmatprep.subr.mxu0 0.0
        %516 = vmatpush1.msra.mxu0 0.0
        %517 = vmatprep.subr.mxu0 0.0
        %518 = vmatpush1.msra.mxu0 0.0
        %519 = vmatprep.subr.mxu0 0.0
        %520 = vmatpush1.msra.mxu0 0.0
        %521 = vmatprep.subr.mxu0 0.0
        %522 = vmatpush1.msra.mxu0 0.0
        %523 = vmatprep.subr.mxu0 0.0
        %524 = vmatpush1.msra.mxu0 0.0
        %525 = vmatprep.subr.mxu0 0.0
        %526 = vmatpush1.msra.mxu0 0.0
        %527 = vmatprep.subr.mxu0 0.0
        %528 = vmatpush1.msra.mxu0 0.0
        %529 = vmatprep.subr.mxu0 0.0
        %530 = vmatpush1.msra.mxu0 0.0
        %531 = vmatprep.subr.mxu0 0.0
        %532 = vmatpush1.msra.mxu0 0.0
        %533 = vmatprep.subr.mxu0 0.0
        %534 = vmatpush1.msra.mxu0 0.0
        %535 = vmatprep.subr.mxu0 0.0
        %536 = vmatpush1.msra.mxu0 0.0
        %537 = vmatprep.subr.mxu0 0.0
        %538 = vmatpush1.msra.mxu0 0.0
        %539 = vmatprep.subr.mxu0 0.0
        %540 = vmatpush1.msra.mxu0 0.0
        %541 = vmatprep.subr.mxu0 0.0
        %542 = vmatpush1.msra.mxu0 0.0
        %543 = vmatprep.subr.mxu0 0.0
        %544 = vmatpush1.msra.mxu0 0.0
        %545 = vmatprep.subr.mxu0 0.0
        %546 = vmatpush1.msra.mxu0 0.0
        %547 = vmatprep.subr.mxu0 0.0
        %548 = vmatpush1.msra.mxu0 0.0
        %549 = vmatprep.subr.mxu0 0.0
        %550 = vmatpush1.msra.mxu0 0.0
        %551 = vmatprep.subr.mxu0 0.0
        %552 = vmatpush1.msra.mxu0 0.0
        %553 = vmatprep.subr.mxu0 0.0
        %554 = vmatpush1.msra.mxu0 0.0
        %555 = vmatprep.subr.mxu0 0.0
        %556 = vmatpush1.msra.mxu0 0.0
        %557 = vmatprep.subr.mxu0 0.0
        %558 = vmatpush1.msra.mxu0 0.0
        %559 = vmatprep.subr.mxu0 0.0
        %560 = vmatpush1.msra.mxu0 0.0
        %561 = vmatprep.mubr.f32.mxu0 0.0
        %562 = vmatmul.mubr.f32.gmra.mrb[0].mxu0 %v486
        %v563 = vpop.f32.mrb[0].mxu0
        %v564 = vadd.f32 %v467, %v563
        %v565 = vpop.f32.mrb[0].mxu0
        %566 = vmatprep.mubr.f32.mxu0 0.0
        %567 = vmatmul.mubr.f32.gmra.mrb[0].mxu0 %v489
        %v568 = vpop.f32.mrb[0].mxu0
        %v569 = vadd.f32 %v472, %v568
        %v570 = vpop.f32.mrb[0].mxu0
        %571 = vmatprep.mubr.f32.mxu0 0.0
        %572 = vmatmul.mubr.f32.gmra.mrb[0].mxu0 %v492
        %v573 = vpop.f32.mrb[0].mxu0
        %v574 = vadd.f32 %v477, %v573
        %v575 = vpop.f32.mrb[0].mxu0
        %576 = vmatprep.mubr.f32.mxu0 0.0
        %577 = vmatmul.mubr.f32.gmra.mrb[0].mxu0 %v495
        %v578 = vpop.f32.mrb[0].mxu0
        %v579 = vadd.f32 %v482, %v578
        %v580 = vpop.f32.mrb[0].mxu0
        %581 = vdwg.mxu0
        %s582 = sld [smem:[#allocation6 + $0x20]]
        %v583 = vstv %s582
        %v584 = vmul.f32 %v583, %v235
        %v585 = vadd.f32 %v246, %v584
        %s586 = sld [smem:[#allocation6 + $0x21]]
        %v587 = vstv %s586
        %v588 = vmul.f32 %v587, %v237
        %v589 = vadd.f32 %v585, %v588
        %s590 = sld [smem:[#allocation6 + $0x22]]
        %v591 = vstv %s590
        %v592 = vmul.f32 %v591, %v239
        %v593 = vadd.f32 %v589, %v592
        %s594 = sld [smem:[#allocation6 + $0x23]]
        %v595 = vstv %s594
        %v596 = vmul.f32 %v595, %v241
        %v597 = vadd.f32 %v593, %v596
        %s598 = sld [smem:[#allocation6 + $0x24]]
        %v599 = vstv %s598
        %v600 = vmul.f32 %v599, %v235
        %v601 = vadd.f32 %v264, %v600
        %s602 = sld [smem:[#allocation6 + $0x25]]
        %v603 = vstv %s602
        %v604 = vmul.f32 %v603, %v237
        %v605 = vadd.f32 %v601, %v604
        %s606 = sld [smem:[#allocation6 + $0x26]]
        %v607 = vstv %s606
        %v608 = vmul.f32 %v607, %v239
        %v609 = vadd.f32 %v605, %v608
        %s610 = sld [smem:[#allocation6 + $0x27]]
        %v611 = vstv %s610
        %v612 = vmul.f32 %v611, %v241
        %v613 = vadd.f32 %v609, %v612
        %s614 = sld [smem:[#allocation6 + $0x28]]
        %v615 = vstv %s614
        %v616 = vmul.f32 %v615, %v235
        %v617 = vadd.f32 %v282, %v616
        %s618 = sld [smem:[#allocation6 + $0x29]]
        %v619 = vstv %s618
        %v620 = vmul.f32 %v619, %v237
        %v621 = vadd.f32 %v617, %v620
        %s622 = sld [smem:[#allocation6 + $0x2a]]
        %v623 = vstv %s622
        %v624 = vmul.f32 %v623, %v239
        %v625 = vadd.f32 %v621, %v624
        %s626 = sld [smem:[#allocation6 + $0x2b]]
        %v627 = vstv %s626
        %v628 = vmul.f32 %v627, %v241
        %v629 = vadd.f32 %v625, %v628
        %s630 = sld [smem:[#allocation6 + $0x2c]]
        %v631 = vstv %s630
        %v632 = vmul.f32 %v631, %v235
        %v633 = vadd.f32 %v300, %v632
        %s634 = sld [smem:[#allocation6 + $0x2d]]
        %v635 = vstv %s634
        %v636 = vmul.f32 %v635, %v237
        %v637 = vadd.f32 %v633, %v636
        %s638 = sld [smem:[#allocation6 + $0x2e]]
        %v639 = vstv %s638
        %v640 = vmul.f32 %v639, %v239
        %v641 = vadd.f32 %v637, %v640
        %s642 = sld [smem:[#allocation6 + $0x2f]]
        %v643 = vstv %s642
        %v644 = vmul.f32 %v643, %v241
        %v645 = vadd.f32 %v641, %v644
        %s646 = scalar_lea.vmem [#allocation7], 64
        %v647 = vld [vmem:[%s646] sm:$0xff]
        %v648 = vld [vmem:[%s646 + $0x8] sm:$0xff]
        %v649 = vld [vmem:[%s646 + $0x10] sm:$0xff]
        %v650 = vld [vmem:[%s646 + $0x18] sm:$0xff]
        %v652 = vsel %vm387, %v597, 0
        %v655 = vsel %vm387, %v613, 0
        %v658 = vsel %vm387, %v629, 0
        %v661 = vsel %vm387, %v645, 0
        %663 = vmatprep.subr.mxu0 0.0
        %664 = vmatpush1.msra.mxu0 %v647
        %665 = vmatprep.subr.mxu0 0.0
        %666 = vmatpush1.msra.mxu0 %v648
        %667 = vmatprep.subr.mxu0 0.0
        %668 = vmatpush1.msra.mxu0 %v649
        %669 = vmatprep.subr.mxu0 0.0
        %670 = vmatpush1.msra.mxu0 %v650
        %671 = vmatprep.subr.mxu0 0.0
        %672 = vmatpush1.msra.mxu0 0.0
        %673 = vmatprep.subr.mxu0 0.0
        %674 = vmatpush1.msra.mxu0 0.0
        %675 = vmatprep.subr.mxu0 0.0
        %676 = vmatpush1.msra.mxu0 0.0
        %677 = vmatprep.subr.mxu0 0.0
        %678 = vmatpush1.msra.mxu0 0.0
        %679 = vmatprep.subr.mxu0 0.0
        %680 = vmatpush1.msra.mxu0 0.0
        %681 = vmatprep.subr.mxu0 0.0
        %682 = vmatpush1.msra.mxu0 0.0
        %683 = vmatprep.subr.mxu0 0.0
        %684 = vmatpush1.msra.mxu0 0.0
        %685 = vmatprep.subr.mxu0 0.0
        %686 = vmatpush1.msra.mxu0 0.0
        %687 = vmatprep.subr.mxu0 0.0
        %688 = vmatpush1.msra.mxu0 0.0
        %689 = vmatprep.subr.mxu0 0.0
        %690 = vmatpush1.msra.mxu0 0.0
        %691 = vmatprep.subr.mxu0 0.0
        %692 = vmatpush1.msra.mxu0 0.0
        %693 = vmatprep.subr.mxu0 0.0
        %694 = vmatpush1.msra.mxu0 0.0
        %695 = vmatprep.subr.mxu0 0.0
        %696 = vmatpush1.msra.mxu0 0.0
        %697 = vmatprep.subr.mxu0 0.0
        %698 = vmatpush1.msra.mxu0 0.0
        %699 = vmatprep.subr.mxu0 0.0
        %700 = vmatpush1.msra.mxu0 0.0
        %701 = vmatprep.subr.mxu0 0.0
        %702 = vmatpush1.msra.mxu0 0.0
        %703 = vmatprep.subr.mxu0 0.0
        %704 = vmatpush1.msra.mxu0 0.0
        %705 = vmatprep.subr.mxu0 0.0
        %706 = vmatpush1.msra.mxu0 0.0
        %707 = vmatprep.subr.mxu0 0.0
        %708 = vmatpush1.msra.mxu0 0.0
        %709 = vmatprep.subr.mxu0 0.0
        %710 = vmatpush1.msra.mxu0 0.0
        %711 = vmatprep.subr.mxu0 0.0
        %712 = vmatpush1.msra.mxu0 0.0
        %713 = vmatprep.subr.mxu0 0.0
        %714 = vmatpush1.msra.mxu0 0.0
        %715 = vmatprep.subr.mxu0 0.0
        %716 = vmatpush1.msra.mxu0 0.0
        %717 = vmatprep.subr.mxu0 0.0
        %718 = vmatpush1.msra.mxu0 0.0
        %719 = vmatprep.subr.mxu0 0.0
        %720 = vmatpush1.msra.mxu0 0.0
        %721 = vmatprep.subr.mxu0 0.0
        %722 = vmatpush1.msra.mxu0 0.0
        %723 = vmatprep.subr.mxu0 0.0
        %724 = vmatpush1.msra.mxu0 0.0
        %725 = vmatprep.subr.mxu0 0.0
        %726 = vmatpush1.msra.mxu0 0.0
        %727 = vmatprep.mubr.f32.mxu0 0.0
        %728 = vmatmul.mubr.f32.gmra.mrb[0].mxu0 %v652
        %v729 = vpop.f32.mrb[0].mxu0
        %v730 = vadd.f32 0.0, %v729
        %v731 = vpop.f32.mrb[0].mxu0
        %732 = vmatprep.mubr.f32.mxu0 0.0
        %733 = vmatmul.mubr.f32.gmra.mrb[0].mxu0 %v655
        %v734 = vpop.f32.mrb[0].mxu0
        %v735 = vadd.f32 0.0, %v734
        %v736 = vpop.f32.mrb[0].mxu0
        %737 = vmatprep.mubr.f32.mxu0 0.0
        %738 = vmatmul.mubr.f32.gmra.mrb[0].mxu0 %v658
        %v739 = vpop.f32.mrb[0].mxu0
        %v740 = vadd.f32 0.0, %v739
        %v741 = vpop.f32.mrb[0].mxu0
        %742 = vmatprep.mubr.f32.mxu0 0.0
        %743 = vmatmul.mubr.f32.gmra.mrb[0].mxu0 %v661
        %v744 = vpop.f32.mrb[0].mxu0
        %v745 = vadd.f32 0.0, %v744
        %v746 = vpop.f32.mrb[0].mxu0
        %747 = vdwg.mxu0
        %v748 = vadd.f32 %v564, %v730
        %v749 = vadd.f32 %v569, %v735
        %v750 = vadd.f32 %v574, %v740
        %v751 = vadd.f32 %v579, %v745
        %s752 = sld [smem:[#allocation6 + $0x30]]
        %v753 = vstv %s752
        %v754 = vmul.f32 %v753, %v235
        %v755 = vadd.f32 %v246, %v754
        %s756 = sld [smem:[#allocation6 + $0x31]]
        %v757 = vstv %s756
        %v758 = vmul.f32 %v757, %v237
        %v759 = vadd.f32 %v755, %v758
        %s760 = sld [smem:[#allocation6 + $0x32]]
        %v761 = vstv %s760
        %v762 = vmul.f32 %v761, %v239
        %v763 = vadd.f32 %v759, %v762
        %s764 = sld [smem:[#allocation6 + $0x33]]
        %v765 = vstv %s764
        %v766 = vmul.f32 %v765, %v241
        %v767 = vadd.f32 %v763, %v766
        %s768 = sld [smem:[#allocation6 + $0x34]]
        %v769 = vstv %s768
        %v770 = vmul.f32 %v769, %v235
        %v771 = vadd.f32 %v264, %v770
        %s772 = sld [smem:[#allocation6 + $0x35]]
        %v773 = vstv %s772
        %v774 = vmul.f32 %v773, %v237
        %v775 = vadd.f32 %v771, %v774
        %s776 = sld [smem:[#allocation6 + $0x36]]
        %v777 = vstv %s776
        %v778 = vmul.f32 %v777, %v239
        %v779 = vadd.f32 %v775, %v778
        %s780 = sld [smem:[#allocation6 + $0x37]]
        %v781 = vstv %s780
        %v782 = vmul.f32 %v781, %v241
        %v783 = vadd.f32 %v779, %v782
        %s784 = sld [smem:[#allocation6 + $0x38]]
        %v785 = vstv %s784
        %v786 = vmul.f32 %v785, %v235
        %v787 = vadd.f32 %v282, %v786
        %s788 = sld [smem:[#allocation6 + $0x39]]
        %v789 = vstv %s788
        %v790 = vmul.f32 %v789, %v237
        %v791 = vadd.f32 %v787, %v790
        %s792 = sld [smem:[#allocation6 + $0x3a]]
        %v793 = vstv %s792
        %v794 = vmul.f32 %v793, %v239
        %v795 = vadd.f32 %v791, %v794
        %s796 = sld [smem:[#allocation6 + $0x3b]]
        %v797 = vstv %s796
        %v798 = vmul.f32 %v797, %v241
        %v799 = vadd.f32 %v795, %v798
        %s800 = sld [smem:[#allocation6 + $0x3c]]
        %v801 = vstv %s800
        %v802 = vmul.f32 %v801, %v235
        %v803 = vadd.f32 %v300, %v802
        %s804 = sld [smem:[#allocation6 + $0x3d]]
        %v805 = vstv %s804
        %v806 = vmul.f32 %v805, %v237
        %v807 = vadd.f32 %v803, %v806
        %s808 = sld [smem:[#allocation6 + $0x3e]]
        %v809 = vstv %s808
        %v810 = vmul.f32 %v809, %v239
        %v811 = vadd.f32 %v807, %v810
        %s812 = sld [smem:[#allocation6 + $0x3f]]
        %v813 = vstv %s812
        %v814 = vmul.f32 %v813, %v241
        %v815 = vadd.f32 %v811, %v814
        %s816 = scalar_lea.vmem [#allocation7], 96
        %v817 = vld [vmem:[%s816] sm:$0xff]
        %v818 = vld [vmem:[%s816 + $0x8] sm:$0xff]
        %v819 = vld [vmem:[%s816 + $0x10] sm:$0xff]
        %v820 = vld [vmem:[%s816 + $0x18] sm:$0xff]
        %v822 = vsel %vm387, %v767, 0
        %v825 = vsel %vm387, %v783, 0
        %v828 = vsel %vm387, %v799, 0
        %v831 = vsel %vm387, %v815, 0
        %833 = vmatprep.subr.mxu0 0.0
        %834 = vmatpush1.msra.mxu0 %v817
        %835 = vmatprep.subr.mxu0 0.0
        %836 = vmatpush1.msra.mxu0 %v818
        %837 = vmatprep.subr.mxu0 0.0
        %838 = vmatpush1.msra.mxu0 %v819
        %839 = vmatprep.subr.mxu0 0.0
        %840 = vmatpush1.msra.mxu0 %v820
        %841 = vmatprep.subr.mxu0 0.0
        %842 = vmatpush1.msra.mxu0 0.0
        %843 = vmatprep.subr.mxu0 0.0
        %844 = vmatpush1.msra.mxu0 0.0
        %845 = vmatprep.subr.mxu0 0.0
        %846 = vmatpush1.msra.mxu0 0.0
        %847 = vmatprep.subr.mxu0 0.0
        %848 = vmatpush1.msra.mxu0 0.0
        %849 = vmatprep.subr.mxu0 0.0
        %850 = vmatpush1.msra.mxu0 0.0
        %851 = vmatprep.subr.mxu0 0.0
        %852 = vmatpush1.msra.mxu0 0.0
        %853 = vmatprep.subr.mxu0 0.0
        %854 = vmatpush1.msra.mxu0 0.0
        %855 = vmatprep.subr.mxu0 0.0
        %856 = vmatpush1.msra.mxu0 0.0
        %857 = vmatprep.subr.mxu0 0.0
        %858 = vmatpush1.msra.mxu0 0.0
        %859 = vmatprep.subr.mxu0 0.0
        %860 = vmatpush1.msra.mxu0 0.0
        %861 = vmatprep.subr.mxu0 0.0
        %862 = vmatpush1.msra.mxu0 0.0
        %863 = vmatprep.subr.mxu0 0.0
        %864 = vmatpush1.msra.mxu0 0.0
        %865 = vmatprep.subr.mxu0 0.0
        %866 = vmatpush1.msra.mxu0 0.0
        %867 = vmatprep.subr.mxu0 0.0
        %868 = vmatpush1.msra.mxu0 0.0
        %869 = vmatprep.subr.mxu0 0.0
        %870 = vmatpush1.msra.mxu0 0.0
        %871 = vmatprep.subr.mxu0 0.0
        %872 = vmatpush1.msra.mxu0 0.0
        %873 = vmatprep.subr.mxu0 0.0
        %874 = vmatpush1.msra.mxu0 0.0
        %875 = vmatprep.subr.mxu0 0.0
        %876 = vmatpush1.msra.mxu0 0.0
        %877 = vmatprep.subr.mxu0 0.0
        %878 = vmatpush1.msra.mxu0 0.0
        %879 = vmatprep.subr.mxu0 0.0
        %880 = vmatpush1.msra.mxu0 0.0
        %881 = vmatprep.subr.mxu0 0.0
        %882 = vmatpush1.msra.mxu0 0.0
        %883 = vmatprep.subr.mxu0 0.0
        %884 = vmatpush1.msra.mxu0 0.0
        %885 = vmatprep.subr.mxu0 0.0
        %886 = vmatpush1.msra.mxu0 0.0
        %887 = vmatprep.subr.mxu0 0.0
        %888 = vmatpush1.msra.mxu0 0.0
        %889 = vmatprep.subr.mxu0 0.0
        %890 = vmatpush1.msra.mxu0 0.0
        %891 = vmatprep.subr.mxu0 0.0
        %892 = vmatpush1.msra.mxu0 0.0
        %893 = vmatprep.subr.mxu0 0.0
        %894 = vmatpush1.msra.mxu0 0.0
        %895 = vmatprep.subr.mxu0 0.0
        %896 = vmatpush1.msra.mxu0 0.0
        %897 = vmatprep.mubr.f32.mxu0 0.0
        %898 = vmatmul.mubr.f32.gmra.mrb[0].mxu0 %v822
        %v899 = vpop.f32.mrb[0].mxu0
        %v900 = vadd.f32 0.0, %v899
        %v901 = vpop.f32.mrb[0].mxu0
        %902 = vmatprep.mubr.f32.mxu0 0.0
        %903 = vmatmul.mubr.f32.gmra.mrb[0].mxu0 %v825
        %v904 = vpop.f32.mrb[0].mxu0
        %v905 = vadd.f32 0.0, %v904
        %v906 = vpop.f32.mrb[0].mxu0
        %907 = vmatprep.mubr.f32.mxu0 0.0
        %908 = vmatmul.mubr.f32.gmra.mrb[0].mxu0 %v828
        %v909 = vpop.f32.mrb[0].mxu0
        %v910 = vadd.f32 0.0, %v909
        %v911 = vpop.f32.mrb[0].mxu0
        %912 = vmatprep.mubr.f32.mxu0 0.0
        %913 = vmatmul.mubr.f32.gmra.mrb[0].mxu0 %v831
        %v914 = vpop.f32.mrb[0].mxu0
        %v915 = vadd.f32 0.0, %v914
        %v916 = vpop.f32.mrb[0].mxu0
        %917 = vdwg.mxu0
        %v918 = vadd.f32 %v748, %v900
        %v919 = vadd.f32 %v749, %v905
        %v920 = vadd.f32 %v750, %v910
        %v921 = vadd.f32 %v751, %v915
        %922 = vst [vmem:[%s234] sm:$0xff] %v918
        %923 = vst [vmem:[%s234 + $0x8] sm:$0xff] %v919
        %924 = vst [vmem:[%s234 + $0x10] sm:$0xff] %v920
        %925 = vst [vmem:[%s234 + $0x18] sm:$0xff] %v921
        %s926 = sand.u32 %s114, 1
        %s927 = scalar_lea.sflag [#allocation4], %s926
        %s928 = sand.u32 %s114, 1
        %s929 = smul.addr %s928, 32
        %s930 = scalar_lea.vmem [#allocation9], %s929
        // Predicated region
        $region45: #{tpu_custom_call.1} parent=31 // pred_check
          %p931 = pneg %p124
        $region46: #{tpu_custom_call.1} parent=31 // pred_check_branch
          %933 = sbr.rel (%p931) target = $region48
        $region47: #{tpu_custom_call.1} parent=31 // pred_region
          %s935 = ssub.s32 512, 512
          %936 = vsyncadd %s927, %s935
          %s937 = smul.addr %s26, 4
          %s938 = sadd.s32 %s27, %s937
          %s939 = smul.addr %s938, 128
          %s940 = scalar_lea.hbm %s3, %s939
          %s941 = sshll.u32 %s930, 4
          %s942 = int_to_ptr.vmem [resolvable:$true] %s941
          %947 = dma.vmem_to_hbm [thread:$0]  %s942, 512, %s940, %s927, 128, 128, 8
        $region48: #{tpu_custom_call.1} parent=31 // pred_fallthru
          _
      $region32: #{tpu_custom_call.1} parent=5 // pred_fallthru
        _
      %p948 = scmp.le.s32.totalorder 2, %s17
      // Predicated region
      $region49: #{tpu_custom_call.1} parent=5 // pred_check
        %p949 = pneg %p948
      $region50: #{tpu_custom_call.1} parent=5 // pred_check_branch
        %951 = sbr.rel (%p949) target = $region52
      $region51: #{tpu_custom_call.1} parent=5 // pred_region
        %s952 = ssub.s32 %s17, 2
        // Predicated region
        $region53: #{tpu_custom_call.1} parent=51 // pred_check
          %p953 = pneg %p130
        $region54: #{tpu_custom_call.1} parent=51 // pred_check_branch
          %955 = sbr.rel (%p953) target = $region56
        $region55: #{tpu_custom_call.1} parent=51 // pred_region
          %s956 = sand.u32 %s115, 1
          %s957 = scalar_lea.sflag [#allocation4], %s956
          %s958 = sand.u32 %s115, 1
          %s959 = smul.addr %s958, 32
          %s960 = scalar_lea.vmem [#allocation9], %s959
          %961 = dma.done %s957, 512
        $region56: #{tpu_custom_call.1} parent=51 // pred_fallthru
          _
      $region52: #{tpu_custom_call.1} parent=5 // pred_fallthru
        _
    $region6: #{tpu_custom_call.1} parent=1 // loop_footer
      %s21 = sadd.s32 1, %s17
    $region7: #{tpu_custom_call.1} parent=1 // loop_footer_branch
      %16 = sbr.rel target = $region3
    $region8: #{tpu_custom_call.1} parent=1 // loop_exit
      _
    %962 = vsyncpa [#allocation3], 1
    %s963 = scalar_lea.sflag [#allocation3], 1
    %964 = vsyncpa %s963, 1
    %965 = vsyncpa [#allocation8], 1
    %966 = vsyncpa [#allocation4], 1
    %s967 = scalar_lea.sflag [#allocation4], 1
    %968 = vsyncpa %s967, 1
    %969 = vsyncpa [#allocation5], 1
    %s970 = scalar_lea.sflag [#allocation5], 1
    %971 = vsyncpa %s970, 1

</llo_original>
